<compile_context>
chip_gen: v7x
topology: tpu7x:2x2x1
jax: 0.10.0
libtpu: 0.0.40
codegen_flags: <defaults>
</compile_context>

<pallas_src>
import functools

import jax
import jax.numpy as jnp
from jax.experimental import pallas as pl
from jax.experimental.pallas import tpu as pltpu

TM_ROWS = 512  # row tile for the memory-bound 1x1-conv kernels


# ---------------------------------------------------------------------------
# Pallas kernels
# ---------------------------------------------------------------------------
def _silu(x):
    # x * sigmoid(x); approx reciprocal lowers to the EUP (keeps VALU free).
    return x * pl.reciprocal(1.0 + jnp.exp(-x), approx=True)


def _dual_pw_kernel(x_ref, w1_ref, b1_ref, w2_ref, b2_ref, o1_ref, o2_ref):
    # conv1 and conv2 (1x1 + folded BN + SiLU) fused: one x read, two matmuls.
    x = x_ref[...]
    y1 = jnp.dot(x, w1_ref[...], preferred_element_type=jnp.float32) + b1_ref[...]
    y2 = jnp.dot(x, w2_ref[...], preferred_element_type=jnp.float32) + b2_ref[...]
    o1_ref[...] = _silu(y1).astype(o1_ref.dtype)
    o2_ref[...] = _silu(y2).astype(o2_ref.dtype)


def _repvgg_core(xe_ref, w_ref, b_ref, mask_ref, wp):
    """Reparameterized 3x3 conv + SiLU over one padded, flattened image.

    xe_ref  : (1, P + 2*wp + 2, C) zero-haloed padded-image rows (bf16)
    w_ref   : (9, C, Cout) per-tap weights (bf16), taps ordered (dy, dx)
    b_ref   : (1, Cout) f32 bias (BN folded, 3x3+1x1 summed)
    mask_ref: (P, 1) f32, 1.0 on interior rows, 0.0 on the padded border
    returns : (P, Cout) f32, border rows zeroed (reusable as padded input)
    """
    p = mask_ref.shape[0]
    acc = jnp.zeros((p, w_ref.shape[2]), jnp.float32)
    for t in range(9):
        dy, dx = divmod(t, 3)
        off = dy * wp + dx                       # static offset into the halo'd slab
        v = xe_ref[0, off:off + p, :]            # contiguous (P, C) slice in VMEM
        acc = acc + jnp.dot(v, w_ref[t], preferred_element_type=jnp.float32)
    return _silu(acc + b_ref[...]) * mask_ref[...]


def _repvgg_kernel(xe_ref, w_ref, b_ref, mask_ref, o_ref, *, wp):
    y = _repvgg_core(xe_ref, w_ref, b_ref, mask_ref, wp)
    o_ref[0] = y.astype(o_ref.dtype)


def _repvgg_tail_pw_kernel(xe_ref, x2_ref, w_ref, b_ref, mask_ref,
                           wc_ref, bc_ref, o_ref, *, wp):
    # last bottleneck + residual add of conv2 path + conv3 (1x1) + SiLU
    y = _repvgg_core(xe_ref, w_ref, b_ref, mask_ref, wp)
    s = y + x2_ref[0].astype(jnp.float32)
    z = jnp.dot(s.astype(wc_ref.dtype), wc_ref[...],
                preferred_element_type=jnp.float32) + bc_ref[...]
    o_ref[0] = _silu(z).astype(o_ref.dtype)


def _repvgg_tail_add_kernel(xe_ref, x2_ref, w_ref, b_ref, mask_ref, o_ref, *, wp):
    # last bottleneck + residual add (conv3 == Identity)
    y = _repvgg_core(xe_ref, w_ref, b_ref, mask_ref, wp)
    o_ref[0] = (y + x2_ref[0].astype(jnp.float32)).astype(o_ref.dtype)


def _add_pw_kernel(a_ref, b_ref, w_ref, bias_ref, o_ref):
    # fallback (num_blocks == 0): conv3(x_1 + x_2), 1x1 + folded BN + SiLU
    s = a_ref[...].astype(jnp.float32) + b_ref[...].astype(jnp.float32)
    y = jnp.dot(s.astype(w_ref.dtype), w_ref[...],
                preferred_element_type=jnp.float32) + bias_ref[...]
    o_ref[...] = _silu(y).astype(o_ref.dtype)


def _add_kernel(a_ref, b_ref, o_ref):
    # fallback (num_blocks == 0, conv3 == Identity)
    o_ref[...] = (a_ref[...].astype(jnp.float32)
                  + b_ref[...].astype(jnp.float32)).astype(o_ref.dtype)


# ---------------------------------------------------------------------------
# pallas_call wrappers
# ---------------------------------------------------------------------------
def _full_spec(shape):
    nd = len(shape)
    return pl.BlockSpec(shape, lambda i: (0,) * nd)


def _cparams():
    # NOTE: for large `hidden` on v7x (64 MiB VMEM) add vmem_limit_bytes here
    # and/or shrink the per-image block; the 9-tap accumulation already acts
    # as K-tiling of the (9*C, C) weight.
    return pltpu.CompilerParams(dimension_semantics=("parallel",))


def dual_pw_conv_silu(x, w1, b1, w2, b2, tm):
    m, cin = x.shape
    hidden = w1.shape[1]
    row_in = pl.BlockSpec((tm, cin), lambda i: (i, 0))
    row_out = pl.BlockSpec((tm, hidden), lambda i: (i, 0))
    return pl.pallas_call(
        _dual_pw_kernel,
        out_shape=(jax.ShapeDtypeStruct((m, hidden), jnp.bfloat16),
                   jax.ShapeDtypeStruct((m, hidden), jnp.bfloat16)),
        grid=(m // tm,),
        in_specs=[row_in, _full_spec(w1.shape), _full_spec(b1.shape),
                  _full_spec(w2.shape), _full_spec(b2.shape)],
        out_specs=(row_out, row_out),
        compiler_params=_cparams(),
    )(x, w1, b1, w2, b2)


def repvgg_block(xe, w, b, mask, wp, p):
    n = xe.shape[0]
    c = w.shape[2]
    kern = functools.partial(_repvgg_kernel, wp=wp)
    return pl.pallas_call(
        kern,
        out_shape=jax.ShapeDtypeStruct((n, p, c), jnp.bfloat16),
        grid=(n,),
        in_specs=[pl.BlockSpec((1,) + xe.shape[1:], lambda i: (i, 0, 0)),
                  _full_spec(w.shape), _full_spec(b.shape),
                  _full_spec(mask.shape)],
        out_specs=pl.BlockSpec((1, p, c), lambda i: (i, 0, 0)),
        compiler_params=_cparams(),
    )(xe, w, b, mask)


def repvgg_tail_pw(xe, x2p, w, b, mask, wc, bc, wp, p):
    n = xe.shape[0]
    cout = wc.shape[1]
    kern = functools.partial(_repvgg_tail_pw_kernel, wp=wp)
    return pl.pallas_call(
        kern,
        out_shape=jax.ShapeDtypeStruct((n, p, cout), jnp.bfloat16),
        grid=(n,),
        in_specs=[pl.BlockSpec((1,) + xe.shape[1:], lambda i: (i, 0, 0)),
                  pl.BlockSpec((1,) + x2p.shape[1:], lambda i: (i, 0, 0)),
                  _full_spec(w.shape), _full_spec(b.shape),
                  _full_spec(mask.shape),
                  _full_spec(wc.shape), _full_spec(bc.shape)],
        out_specs=pl.BlockSpec((1, p, cout), lambda i: (i, 0, 0)),
        compiler_params=_cparams(),
    )(xe, x2p, w, b, mask, wc, bc)


def repvgg_tail_add(xe, x2p, w, b, mask, wp, p):
    n = xe.shape[0]
    c = w.shape[2]
    kern = functools.partial(_repvgg_tail_add_kernel, wp=wp)
    return pl.pallas_call(
        kern,
        out_shape=jax.ShapeDtypeStruct((n, p, c), jnp.bfloat16),
        grid=(n,),
        in_specs=[pl.BlockSpec((1,) + xe.shape[1:], lambda i: (i, 0, 0)),
                  pl.BlockSpec((1,) + x2p.shape[1:], lambda i: (i, 0, 0)),
                  _full_spec(w.shape), _full_spec(b.shape),
                  _full_spec(mask.shape)],
        out_specs=pl.BlockSpec((1, p, c), lambda i: (i, 0, 0)),
        compiler_params=_cparams(),
    )(xe, x2p, w, b, mask)


def add_pw_conv_silu(a, b, w, bias, tm):
    m, c = a.shape
    cout = w.shape[1]
    row = pl.BlockSpec((tm, c), lambda i: (i, 0))
    return pl.pallas_call(
        _add_pw_kernel,
        out_shape=jax.ShapeDtypeStruct((m, cout), jnp.bfloat16),
        grid=(m // tm,),
        in_specs=[row, row, _full_spec(w.shape), _full_spec(bias.shape)],
        out_specs=pl.BlockSpec((tm, cout), lambda i: (i, 0)),
        compiler_params=_cparams(),
    )(a, b, w, bias)


def add_rows(a, b, tm):
    m, c = a.shape
    row = pl.BlockSpec((tm, c), lambda i: (i, 0))
    return pl.pallas_call(
        _add_kernel,
        out_shape=jax.ShapeDtypeStruct((m, c), jnp.bfloat16),
        grid=(m // tm,),
        in_specs=[row, row],
        out_specs=row,
        compiler_params=_cparams(),
    )(a, b)


# ---------------------------------------------------------------------------
# Parameter construction (deterministic, BN folded, RepVGG reparameterized)
# ---------------------------------------------------------------------------
def _fuse_bn(w, gamma, beta, mean, var, eps=1e-5):
    scale = gamma / jnp.sqrt(var + eps)
    return w * scale[:, None, None, None], beta - mean * scale


def _make_conv_bn(key, cin, cout, k):
    k1, k2, k3, k4, k5 = jax.random.split(key, 5)
    w = jax.random.normal(k1, (cout, cin, k, k), jnp.float32) * 0.1
    gamma = jax.random.uniform(k2, (cout,), jnp.float32, 0.5, 1.5)
    beta = jax.random.normal(k3, (cout,), jnp.float32) * 0.1
    mean = jax.random.normal(k4, (cout,), jnp.float32) * 0.1
    var = jax.random.uniform(k5, (cout,), jnp.float32, 0.5, 1.5)
    return _fuse_bn(w, gamma, beta, mean, var)


def init_csp_params(key, in_channels, out_channels, num_blocks=3, expansion=1.0):
    hidden = int(out_channels * expansion)
    keys = jax.random.split(key, 3 + 2 * num_blocks)
    params = {"hidden": hidden}

    w, b = _make_conv_bn(keys[0], in_channels, hidden, 1)
    params["w1"], params["b1"] = w[:, :, 0, 0].T.astype(jnp.bfloat16), b[None, :]
    w, b = _make_conv_bn(keys[1], in_channels, hidden, 1)
    params["w2"], params["b2"] = w[:, :, 0, 0].T.astype(jnp.bfloat16), b[None, :]

    blocks = []
    for i in range(num_blocks):
        k3x3, b3 = _make_conv_bn(keys[2 + 2 * i], hidden, hidden, 3)
        k1x1, b1 = _make_conv_bn(keys[3 + 2 * i], hidden, hidden, 1)
        # RepVGG deploy reparameterization: 1x1 branch folded into the centre
        # (dy=1, dx=1) tap of the 3x3 kernel, biases summed -> one conv/block.
        k_rep = k3x3.at[:, :, 1, 1].add(k1x1[:, :, 0, 0])
        b_rep = b3 + b1
        # per-tap weights, taps ordered t = 3*dy + dx: (9, cin, cout)
        w_taps = k_rep.transpose(2, 3, 1, 0).reshape(9, hidden, hidden)
        blocks.append({"w": w_taps.astype(jnp.bfloat16), "b": b_rep[None, :]})
    params["blocks"] = blocks

    if hidden != out_channels:
        w, b = _make_conv_bn(keys[2 + 2 * num_blocks], hidden, out_channels, 1)
        params["w3c"], params["b3c"] = w[:, :, 0, 0].T.astype(jnp.bfloat16), b[None, :]
    return params


# ---------------------------------------------------------------------------
# Wrapper glue
# ---------------------------------------------------------------------------
def _rows_and_tile(m):
    mp = pl.cdiv(m, 8) * 8
    if mp <= TM_ROWS:
        return mp, mp
    mp = pl.cdiv(mp, TM_ROWS) * TM_ROWS
    return mp, TM_ROWS


def _to_padded_flat(y_nhwc):
    # (N, H, W, C) -> zero-padded, row-flattened (N, (H+2)*(W+2), C)   [glue]
    n, h, w, c = y_nhwc.shape
    yp = jnp.pad(y_nhwc, ((0, 0), (1, 1), (1, 1), (0, 0)))
    return yp.reshape(n, (h + 2) * (w + 2), c)


def _add_halo(y_flat, wp):
    # extra (wp+1)-row zero halo needed by the 9-tap constant-offset slices [glue]
    return jnp.pad(y_flat, ((0, 0), (wp + 1, wp + 1), (0, 0)))


def csp_rep_layer(x_nchw, params):
    n, cin, h, w = x_nchw.shape
    hidden = params["hidden"]
    hp, wp = h + 2, w + 2
    p = hp * wp
    m = n * h * w

    # NCHW -> row-major NHWC rows, bf16 (glue)
    x = jnp.transpose(x_nchw, (0, 2, 3, 1)).reshape(m, cin).astype(jnp.bfloat16)
    mp, tm = _rows_and_tile(m)
    if mp != m:
        x = jnp.pad(x, ((0, mp - m), (0, 0)))

    # conv1 + conv2 fused: one read of x, two matmuls, SiLU
    x1_rows, x2_rows = dual_pw_conv_silu(x, params["w1"], params["b1"],
                                         params["w2"], params["b2"], tm)
    x1 = x1_rows[:m].reshape(n, h, w, hidden)
    x2 = x2_rows[:m].reshape(n, h, w, hidden)

    # interior mask in padded-flat coordinates (trace-time constant)
    ridx = jnp.arange(p)
    interior = ((ridx // wp >= 1) & (ridx // wp <= h) &
                (ridx % wp >= 1) & (ridx % wp <= w))
    mask = interior.astype(jnp.float32)[:, None]            # (P, 1)

    blocks = params["blocks"]
    if blocks:
        y = _to_padded_flat(x1)                              # (N, P, hidden)
        for blk in blocks[:-1]:
            y = repvgg_block(_add_halo(y, wp), blk["w"], blk["b"], mask, wp, p)
        blk = blocks[-1]
        x2p = _to_padded_flat(x2)
        if "w3c" in params:      # last block fused with residual add + conv3
            out_p = repvgg_tail_pw(_add_halo(y, wp), x2p, blk["w"], blk["b"],
                                   mask, params["w3c"], params["b3c"], wp, p)
        else:                    # conv3 == Identity
            out_p = repvgg_tail_add(_add_halo(y, wp), x2p, blk["w"], blk["b"],
                                    mask, wp, p)
        cout = out_p.shape[-1]
        out = out_p.reshape(n, hp, wp, cout)[:, 1:h + 1, 1:w + 1, :]
    else:
        # num_blocks == 0: out = conv3(x_1 + x_2)
        if "w3c" in params:
            out_rows = add_pw_conv_silu(x1_rows, x2_rows,
                                        params["w3c"], params["b3c"], tm)
        else:
            out_rows = add_rows(x1_rows, x2_rows, tm)
        cout = out_rows.shape[-1]
        out = out_rows[:m].reshape(n, h, w, cout)

    return out.astype(jnp.float32).transpose(0, 3, 1, 2)    # back to NCHW


if __name__ == "__main__":
    key = jax.random.PRNGKey(0)
    kx, kp = jax.random.split(key)

    # CSPRepLayer(in_channels=4, out_channels=8, num_blocks=3, expansion=0.5, act='silu')
    x = jax.random.normal(kx, (2, 4, 16, 16), jnp.float32)
    params = init_csp_params(kp, in_channels=4, out_channels=8,
                             num_blocks=3, expansion=0.5)

    out = csp_rep_layer(x, params)
    out = jax.block_until_ready(out)
    assert out.shape == (2, 8, 16, 16), out.shape
    assert bool(jnp.all(jnp.isfinite(out)))
    print("KERNEL_OK")
</pallas_src>

<mosaic_0001>
module attributes {stable_mosaic.version = 11 : i64} {
  func.func @_dual_pw_kernel(%arg0: i32, %arg1: memref<512x4xbf16, #tpu.memory_space<vmem>>, %arg2: memref<4x4xbf16, #tpu.memory_space<vmem>>, %arg3: memref<1x4xf32, #tpu.memory_space<vmem>>, %arg4: memref<4x4xbf16, #tpu.memory_space<vmem>>, %arg5: memref<1x4xf32, #tpu.memory_space<vmem>>, %arg6: memref<512x4xbf16, #tpu.memory_space<vmem>>, %arg7: memref<512x4xbf16, #tpu.memory_space<vmem>>) attributes {dimension_semantics = [#tpu.dimension_semantics<parallel>], iteration_bounds = array<i64: 1>, scalar_prefetch = 0 : i64, scratch_operands = 0 : i64, tpu.core_type = #tpu.core_type<tc>, window_params = [{transform_indices = @transform_0, window_bounds = array<i64: 512, 4>}, {pipeline_mode = #tpu.pipeline_mode<synchronous>, transform_indices = @transform_1, window_bounds = array<i64: 4, 4>}, {pipeline_mode = #tpu.pipeline_mode<synchronous>, transform_indices = @transform_2, window_bounds = array<i64: 1, 4>}, {pipeline_mode = #tpu.pipeline_mode<synchronous>, transform_indices = @transform_3, window_bounds = array<i64: 4, 4>}, {pipeline_mode = #tpu.pipeline_mode<synchronous>, transform_indices = @transform_4, window_bounds = array<i64: 1, 4>}, {transform_indices = @transform_5, window_bounds = array<i64: 512, 4>}, {transform_indices = @transform_6, window_bounds = array<i64: 512, 4>}]} {
    %c0 = arith.constant 0 : index
    %c0_0 = arith.constant 0 : index
    %0 = vector.load %arg1[%c0, %c0_0] : memref<512x4xbf16, #tpu.memory_space<vmem>>, vector<512x4xbf16>
    %c0_1 = arith.constant 0 : index
    %c0_2 = arith.constant 0 : index
    %1 = vector.load %arg2[%c0_1, %c0_2] : memref<4x4xbf16, #tpu.memory_space<vmem>>, vector<4x4xbf16>
    %cst = arith.constant dense<0.000000e+00> : vector<512x4xf32>
    %2 = tpu.matmul %0, %1, %cst {dimension_numbers = #tpu.dot_dimension_numbers<[1], [0], [0], [1], [0, 0, 1, 1], [], []>} : vector<512x4xbf16>, vector<4x4xbf16>, vector<512x4xf32> -> vector<512x4xf32>
    %c0_3 = arith.constant 0 : index
    %c0_4 = arith.constant 0 : index
    %3 = vector.load %arg3[%c0_3, %c0_4] : memref<1x4xf32, #tpu.memory_space<vmem>>, vector<1x4xf32>
    %4 = vector.broadcast %3 : vector<1x4xf32> to vector<512x4xf32>
    %5 = arith.addf %2, %4 : vector<512x4xf32>
    %c0_5 = arith.constant 0 : index
    %c0_6 = arith.constant 0 : index
    %6 = vector.load %arg4[%c0_5, %c0_6] : memref<4x4xbf16, #tpu.memory_space<vmem>>, vector<4x4xbf16>
    %cst_7 = arith.constant dense<0.000000e+00> : vector<512x4xf32>
    %7 = tpu.matmul %0, %6, %cst_7 {dimension_numbers = #tpu.dot_dimension_numbers<[1], [0], [0], [1], [0, 0, 1, 1], [], []>} : vector<512x4xbf16>, vector<4x4xbf16>, vector<512x4xf32> -> vector<512x4xf32>
    %c0_8 = arith.constant 0 : index
    %c0_9 = arith.constant 0 : index
    %8 = vector.load %arg5[%c0_8, %c0_9] : memref<1x4xf32, #tpu.memory_space<vmem>>, vector<1x4xf32>
    %9 = vector.broadcast %8 : vector<1x4xf32> to vector<512x4xf32>
    %10 = arith.addf %7, %9 : vector<512x4xf32>
    %cst_10 = arith.constant 0.000000e+00 : f32
    %11 = vector.broadcast %cst_10 : f32 to vector<512x4xf32>
    %12 = arith.subf %11, %5 : vector<512x4xf32>
    %13 = math.exp %12 : vector<512x4xf32>
    %cst_11 = arith.constant 1.000000e+00 : f32
    %14 = vector.broadcast %cst_11 : f32 to vector<512x4xf32>
    %15 = arith.addf %14, %13 : vector<512x4xf32>
    %16 = tpu.reciprocal %15 {approx = true} : vector<512x4xf32> -> vector<512x4xf32>
    %17 = arith.mulf %5, %16 : vector<512x4xf32>
    %18 = arith.truncf %17 : vector<512x4xf32> to vector<512x4xbf16>
    %c0_12 = arith.constant 0 : index
    %c0_13 = arith.constant 0 : index
    %19 = vector.load %arg6[%c0_12, %c0_13] : memref<512x4xbf16, #tpu.memory_space<vmem>>, vector<512x4xbf16>
    tpu.vector_store %arg6[%c0_12, %c0_13], %18 {strides = array<i32>} : memref<512x4xbf16, #tpu.memory_space<vmem>>, vector<512x4xbf16>,
    %cst_14 = arith.constant 0.000000e+00 : f32
    %20 = vector.broadcast %cst_14 : f32 to vector<512x4xf32>
    %21 = arith.subf %20, %10 : vector<512x4xf32>
    %22 = math.exp %21 : vector<512x4xf32>
    %cst_15 = arith.constant 1.000000e+00 : f32
    %23 = vector.broadcast %cst_15 : f32 to vector<512x4xf32>
    %24 = arith.addf %23, %22 : vector<512x4xf32>
    %25 = tpu.reciprocal %24 {approx = true} : vector<512x4xf32> -> vector<512x4xf32>
    %26 = arith.mulf %10, %25 : vector<512x4xf32>
    %27 = arith.truncf %26 : vector<512x4xf32> to vector<512x4xbf16>
    %c0_16 = arith.constant 0 : index
    %c0_17 = arith.constant 0 : index
    %28 = vector.load %arg7[%c0_16, %c0_17] : memref<512x4xbf16, #tpu.memory_space<vmem>>, vector<512x4xbf16>
    tpu.vector_store %arg7[%c0_16, %c0_17], %27 {strides = array<i32>} : memref<512x4xbf16, #tpu.memory_space<vmem>>, vector<512x4xbf16>,
    return
  }
  func.func @transform_0(%arg0: i32) -> (i32, i32) {
    %c0_i32 = arith.constant 0 : i32
    %c0_i32_0 = arith.constant 0 : i32
    return %arg0, %c0_i32 : i32, i32
  }
  func.func @transform_1(%arg0: i32) -> (i32, i32) {
    %c0_i32 = arith.constant 0 : i32
    %c0_i32_0 = arith.constant 0 : i32
    %c0_i32_1 = arith.constant 0 : i32
    return %c0_i32, %c0_i32_0 : i32, i32
  }
  func.func @transform_2(%arg0: i32) -> (i32, i32) {
    %c0_i32 = arith.constant 0 : i32
    %c0_i32_0 = arith.constant 0 : i32
    %c0_i32_1 = arith.constant 0 : i32
    return %c0_i32, %c0_i32_0 : i32, i32
  }
  func.func @transform_3(%arg0: i32) -> (i32, i32) {
    %c0_i32 = arith.constant 0 : i32
    %c0_i32_0 = arith.constant 0 : i32
    %c0_i32_1 = arith.constant 0 : i32
    return %c0_i32, %c0_i32_0 : i32, i32
  }
  func.func @transform_4(%arg0: i32) -> (i32, i32) {
    %c0_i32 = arith.constant 0 : i32
    %c0_i32_0 = arith.constant 0 : i32
    %c0_i32_1 = arith.constant 0 : i32
    return %c0_i32, %c0_i32_0 : i32, i32
  }
  func.func @transform_5(%arg0: i32) -> (i32, i32) {
    %c0_i32 = arith.constant 0 : i32
    %c0_i32_0 = arith.constant 0 : i32
    return %arg0, %c0_i32 : i32, i32
  }
  func.func @transform_6(%arg0: i32) -> (i32, i32) {
    %c0_i32 = arith.constant 0 : i32
    %c0_i32_0 = arith.constant 0 : i32
    return %arg0, %c0_i32 : i32, i32
  }
}

</mosaic_0001>

<llo_original>
// kernel: tpu_custom_call.1
$region0: #{tpu_custom_call.1}
  #allocation0 [shape = 'u32[]', space=smem, size = 0x4, offset = 0x4, fixed_abs, tag = 'smem constant byte address 0x4 - core index']
  #allocation1 [shape = 'u32[144,128]{1,0:T(1,128)}', space=vmem, size = 0x12000, scoped, tag = 'internal scratch']
  %s0 = inlined_call_operand.vmem [shape: bf16[512,4], index: 0, kind: input, shape index: {}]
  %s1 = inlined_call_operand.vmem [shape: bf16[4,4], index: 1, kind: input, shape index: {}]
  %s2 = inlined_call_operand.vmem [shape: f32[1,4], index: 2, kind: input, shape index: {}]
  %s3 = inlined_call_operand.vmem [shape: bf16[4,4], index: 3, kind: input, shape index: {}]
  %s4 = inlined_call_operand.vmem [shape: f32[1,4], index: 4, kind: input, shape index: {}]
  %s5 = inlined_call_operand.vmem [shape: bf16[512,4], index: 5, kind: output, shape index: {0}]
  %s6 = inlined_call_operand.vmem [shape: bf16[512,4], index: 6, kind: output, shape index: {1}]
  %7 = xla_tuple %s5, %s6
  %s8 = sld [smem:[#allocation0]]
  $region38: #{tpu_custom_call.1} parent=0
    _
  %s10 = ssub.s32 1, %s8
  %s11 = scalar_select 0, %s10, %s8
  // Predicated region
  $region2: #{tpu_custom_call.1} parent=0 // pred_check
    _
  $region3: #{tpu_custom_call.1} parent=0 // pred_check_branch
    %13 = sbr.rel (0) target = $region5
  $region4: #{tpu_custom_call.1} parent=0 // pred_region
    _
  $region5: #{tpu_custom_call.1} parent=0 // pred_fallthru
    _
  // Predicated region
  $region6: #{tpu_custom_call.1} parent=0 // pred_check
    _
  $region7: #{tpu_custom_call.1} parent=0 // pred_check_branch
    %15 = sbr.rel (0) target = $region9
  $region8: #{tpu_custom_call.1} parent=0 // pred_region
    _
  $region9: #{tpu_custom_call.1} parent=0 // pred_fallthru
    _
  // Predicated region
  $region10: #{tpu_custom_call.1} parent=0 // pred_check
    _
  $region11: #{tpu_custom_call.1} parent=0 // pred_check_branch
    %17 = sbr.rel (0) target = $region13
  $region12: #{tpu_custom_call.1} parent=0 // pred_region
    _
  $region13: #{tpu_custom_call.1} parent=0 // pred_fallthru
    _
  // Predicated region
  $region14: #{tpu_custom_call.1} parent=0 // pred_check
    _
  $region15: #{tpu_custom_call.1} parent=0 // pred_check_branch
    %19 = sbr.rel (0) target = $region17
  $region16: #{tpu_custom_call.1} parent=0 // pred_region
    _
  $region17: #{tpu_custom_call.1} parent=0 // pred_fallthru
    _
  // Predicated region
  $region18: #{tpu_custom_call.1} parent=0 // pred_check
    _
  $region19: #{tpu_custom_call.1} parent=0 // pred_check_branch
    %21 = sbr.rel (0) target = $region21
  $region20: #{tpu_custom_call.1} parent=0 // pred_region
    _
  $region21: #{tpu_custom_call.1} parent=0 // pred_fallthru
    _
  %v23 = vld [vmem:[%s0] sm:$0xf]
  %v24 = vld [vmem:[%s0 + $0x4] sm:$0xf]
  %v25 = vld [vmem:[%s0 + $0x8] sm:$0xf]
  %v26 = vld [vmem:[%s0 + $0xc] sm:$0xf]
  %v27 = vld [vmem:[%s0 + $0x10] sm:$0xf]
  %v28 = vld [vmem:[%s0 + $0x14] sm:$0xf]
  %v29 = vld [vmem:[%s0 + $0x18] sm:$0xf]
  %v30 = vld [vmem:[%s0 + $0x1c] sm:$0xf]
  %v31 = vld [vmem:[%s0 + $0x20] sm:$0xf]
  %v32 = vld [vmem:[%s0 + $0x24] sm:$0xf]
  %v33 = vld [vmem:[%s0 + $0x28] sm:$0xf]
  %v34 = vld [vmem:[%s0 + $0x2c] sm:$0xf]
  %v35 = vld [vmem:[%s0 + $0x30] sm:$0xf]
  %v36 = vld [vmem:[%s0 + $0x34] sm:$0xf]
  %v37 = vld [vmem:[%s0 + $0x38] sm:$0xf]
  %v38 = vld [vmem:[%s0 + $0x3c] sm:$0xf]
  %v39 = vld [vmem:[%s0 + $0x40] sm:$0xf]
  %v40 = vld [vmem:[%s0 + $0x44] sm:$0xf]
  %v41 = vld [vmem:[%s0 + $0x48] sm:$0xf]
  %v42 = vld [vmem:[%s0 + $0x4c] sm:$0xf]
  %v43 = vld [vmem:[%s0 + $0x50] sm:$0xf]
  %v44 = vld [vmem:[%s0 + $0x54] sm:$0xf]
  %v45 = vld [vmem:[%s0 + $0x58] sm:$0xf]
  %v46 = vld [vmem:[%s0 + $0x5c] sm:$0xf]
  %v47 = vld [vmem:[%s0 + $0x60] sm:$0xf]
  %v48 = vld [vmem:[%s0 + $0x64] sm:$0xf]
  %v49 = vld [vmem:[%s0 + $0x68] sm:$0xf]
  %v50 = vld [vmem:[%s0 + $0x6c] sm:$0xf]
  %v51 = vld [vmem:[%s0 + $0x70] sm:$0xf]
  %v52 = vld [vmem:[%s0 + $0x74] sm:$0xf]
  %v53 = vld [vmem:[%s0 + $0x78] sm:$0xf]
  %v54 = vld [vmem:[%s0 + $0x7c] sm:$0xf]
  %v55 = vld [vmem:[%s0 + $0x80] sm:$0xf]
  %v56 = vld [vmem:[%s0 + $0x84] sm:$0xf]
  %v57 = vld [vmem:[%s0 + $0x88] sm:$0xf]
  %v58 = vld [vmem:[%s0 + $0x8c] sm:$0xf]
  %v59 = vld [vmem:[%s0 + $0x90] sm:$0xf]
  %v60 = vld [vmem:[%s0 + $0x94] sm:$0xf]
  %v61 = vld [vmem:[%s0 + $0x98] sm:$0xf]
  %v62 = vld [vmem:[%s0 + $0x9c] sm:$0xf]
  %v63 = vld [vmem:[%s0 + $0xa0] sm:$0xf]
  %v64 = vld [vmem:[%s0 + $0xa4] sm:$0xf]
  %v65 = vld [vmem:[%s0 + $0xa8] sm:$0xf]
  %v66 = vld [vmem:[%s0 + $0xac] sm:$0xf]
  %v67 = vld [vmem:[%s0 + $0xb0] sm:$0xf]
  %v68 = vld [vmem:[%s0 + $0xb4] sm:$0xf]
  %v69 = vld [vmem:[%s0 + $0xb8] sm:$0xf]
  %v70 = vld [vmem:[%s0 + $0xbc] sm:$0xf]
  %v71 = vld [vmem:[%s0 + $0xc0] sm:$0xf]
  %v72 = vld [vmem:[%s0 + $0xc4] sm:$0xf]
  %v73 = vld [vmem:[%s0 + $0xc8] sm:$0xf]
  %v74 = vld [vmem:[%s0 + $0xcc] sm:$0xf]
  %v75 = vld [vmem:[%s0 + $0xd0] sm:$0xf]
  %v76 = vld [vmem:[%s0 + $0xd4] sm:$0xf]
  %v77 = vld [vmem:[%s0 + $0xd8] sm:$0xf]
  %v78 = vld [vmem:[%s0 + $0xdc] sm:$0xf]
  %v79 = vld [vmem:[%s0 + $0xe0] sm:$0xf]
  %v80 = vld [vmem:[%s0 + $0xe4] sm:$0xf]
  %v81 = vld [vmem:[%s0 + $0xe8] sm:$0xf]
  %v82 = vld [vmem:[%s0 + $0xec] sm:$0xf]
  %v83 = vld [vmem:[%s0 + $0xf0] sm:$0xf]
  %v84 = vld [vmem:[%s0 + $0xf4] sm:$0xf]
  %v85 = vld [vmem:[%s0 + $0xf8] sm:$0xf]
  %v86 = vld [vmem:[%s0 + $0xfc] sm:$0xf]
  %v87 = vld [vmem:[%s1] sm:$0x3]
  %v88 = vld [vmem:[%s2] sm:$0x1]
  %v90 = vlaneseq
  %v91 = vshrl.u32 %v90, 7
  %v92 = vsub.s32 0, %v91
  %v93 = vrot.slane %v88, %v92
  %v159 = vunpack.c.l.b16 %v23
  %v160 = vunpack.c.l.b16 %v24
  %v161 = vunpack.c.l.b16 %v25
  %v162 = vunpack.c.l.b16 %v26
  %v163 = vunpack.c.l.b16 %v27
  %v164 = vunpack.c.l.b16 %v28
  %v165 = vunpack.c.l.b16 %v29
  %v166 = vunpack.c.l.b16 %v30
  %v167 = vunpack.c.l.b16 %v31
  %v168 = vunpack.c.l.b16 %v32
  %v169 = vunpack.c.l.b16 %v33
  %v170 = vunpack.c.l.b16 %v34
  %v171 = vunpack.c.l.b16 %v35
  %v172 = vunpack.c.l.b16 %v36
  %v173 = vunpack.c.l.b16 %v37
  %v174 = vunpack.c.l.b16 %v38
  %v175 = vunpack.c.l.b16 %v39
  %v176 = vunpack.c.l.b16 %v40
  %v177 = vunpack.c.l.b16 %v41
  %v178 = vunpack.c.l.b16 %v42
  %v179 = vunpack.c.l.b16 %v43
  %v180 = vunpack.c.l.b16 %v44
  %v181 = vunpack.c.l.b16 %v45
  %v182 = vunpack.c.l.b16 %v46
  %v183 = vunpack.c.l.b16 %v47
  %v184 = vunpack.c.l.b16 %v48
  %v185 = vunpack.c.l.b16 %v49
  %v186 = vunpack.c.l.b16 %v50
  %v187 = vunpack.c.l.b16 %v51
  %v188 = vunpack.c.l.b16 %v52
  %v189 = vunpack.c.l.b16 %v53
  %v190 = vunpack.c.l.b16 %v54
  %v191 = vunpack.c.l.b16 %v55
  %v192 = vunpack.c.l.b16 %v56
  %v193 = vunpack.c.l.b16 %v57
  %v194 = vunpack.c.l.b16 %v58
  %v195 = vunpack.c.l.b16 %v59
  %v196 = vunpack.c.l.b16 %v60
  %v197 = vunpack.c.l.b16 %v61
  %v198 = vunpack.c.l.b16 %v62
  %v199 = vunpack.c.l.b16 %v63
  %v200 = vunpack.c.l.b16 %v64
  %v201 = vunpack.c.l.b16 %v65
  %v202 = vunpack.c.l.b16 %v66
  %v203 = vunpack.c.l.b16 %v67
  %v204 = vunpack.c.l.b16 %v68
  %v205 = vunpack.c.l.b16 %v69
  %v206 = vunpack.c.l.b16 %v70
  %v207 = vunpack.c.l.b16 %v71
  %v208 = vunpack.c.l.b16 %v72
  %v209 = vunpack.c.l.b16 %v73
  %v210 = vunpack.c.l.b16 %v74
  %v211 = vunpack.c.l.b16 %v75
  %v212 = vunpack.c.l.b16 %v76
  %v213 = vunpack.c.l.b16 %v77
  %v214 = vunpack.c.l.b16 %v78
  %v215 = vunpack.c.l.b16 %v79
  %v216 = vunpack.c.l.b16 %v80
  %v217 = vunpack.c.l.b16 %v81
  %v218 = vunpack.c.l.b16 %v82
  %v219 = vunpack.c.l.b16 %v83
  %v220 = vunpack.c.l.b16 %v84
  %v221 = vunpack.c.l.b16 %v85
  %v222 = vunpack.c.l.b16 %v86
  %v223 = vpack.c.b16 %v160, %v159
  %v224 = vpack.c.b16 %v162, %v161
  %v225 = vpack.c.b16 %v164, %v163
  %v226 = vpack.c.b16 %v166, %v165
  %v227 = vpack.c.b16 %v168, %v167
  %v228 = vpack.c.b16 %v170, %v169
  %v229 = vpack.c.b16 %v172, %v171
  %v230 = vpack.c.b16 %v174, %v173
  %v231 = vpack.c.b16 %v176, %v175
  %v232 = vpack.c.b16 %v178, %v177
  %v233 = vpack.c.b16 %v180, %v179
  %v234 = vpack.c.b16 %v182, %v181
  %v235 = vpack.c.b16 %v184, %v183
  %v236 = vpack.c.b16 %v186, %v185
  %v237 = vpack.c.b16 %v188, %v187
  %v238 = vpack.c.b16 %v190, %v189
  %v239 = vpack.c.b16 %v192, %v191
  %v240 = vpack.c.b16 %v194, %v193
  %v241 = vpack.c.b16 %v196, %v195
  %v242 = vpack.c.b16 %v198, %v197
  %v243 = vpack.c.b16 %v200, %v199
  %v244 = vpack.c.b16 %v202, %v201
  %v245 = vpack.c.b16 %v204, %v203
  %v246 = vpack.c.b16 %v206, %v205
  %v247 = vpack.c.b16 %v208, %v207
  %v248 = vpack.c.b16 %v210, %v209
  %v249 = vpack.c.b16 %v212, %v211
  %v250 = vpack.c.b16 %v214, %v213
  %v251 = vpack.c.b16 %v216, %v215
  %v252 = vpack.c.b16 %v218, %v217
  %v253 = vpack.c.b16 %v220, %v219
  %v254 = vpack.c.b16 %v222, %v221
  %vm255 = vcmask 31744
  %v257 = vsel %vm255, %v223, 0
  %v260 = vsel %vm255, %v224, 0
  %v263 = vsel %vm255, %v225, 0
  %v266 = vsel %vm255, %v226, 0
  %v269 = vsel %vm255, %v227, 0
  %v272 = vsel %vm255, %v228, 0
  %v275 = vsel %vm255, %v229, 0
  %v278 = vsel %vm255, %v230, 0
  %v281 = vsel %vm255, %v231, 0
  %v284 = vsel %vm255, %v232, 0
  %v287 = vsel %vm255, %v233, 0
  %v290 = vsel %vm255, %v234, 0
  %v293 = vsel %vm255, %v235, 0
  %v296 = vsel %vm255, %v236, 0
  %v299 = vsel %vm255, %v237, 0
  %v302 = vsel %vm255, %v238, 0
  %v305 = vsel %vm255, %v239, 0
  %v308 = vsel %vm255, %v240, 0
  %v311 = vsel %vm255, %v241, 0
  %v314 = vsel %vm255, %v242, 0
  %v317 = vsel %vm255, %v243, 0
  %v320 = vsel %vm255, %v244, 0
  %v323 = vsel %vm255, %v245, 0
  %v326 = vsel %vm255, %v246, 0
  %v329 = vsel %vm255, %v247, 0
  %v332 = vsel %vm255, %v248, 0
  %v335 = vsel %vm255, %v249, 0
  %v338 = vsel %vm255, %v250, 0
  %v341 = vsel %vm255, %v251, 0
  %v344 = vsel %vm255, %v252, 0
  %v347 = vsel %vm255, %v253, 0
  %v350 = vsel %vm255, %v254, 0
  %vm352 = vcmask 1041408
  %v354 = vsel %vm352, %v87, 0
  %356 = vmatprep.subr.bf16.mxu0 0
  %357 = vmatpush1.bf16.msra.mxu0 %v354
  %358 = vmatprep.subr.bf16.mxu0 0
  %359 = vmatpush1.bf16.msra.mxu0 0
  %360 = vmatprep.subr.bf16.mxu0 0
  %361 = vmatpush1.bf16.msra.mxu0 0
  %362 = vmatprep.subr.bf16.mxu0 0
  %363 = vmatpush1.bf16.msra.mxu0 0
  %364 = vmatprep.subr.bf16.mxu0 0
  %365 = vmatpush1.bf16.msra.mxu0 0
  %366 = vmatprep.subr.bf16.mxu0 0
  %367 = vmatpush1.bf16.msra.mxu0 0
  %368 = vmatprep.subr.bf16.mxu0 0
  %369 = vmatpush1.bf16.msra.mxu0 0
  %370 = vmatprep.subr.bf16.mxu0 0
  %371 = vmatpush1.bf16.msra.mxu0 0
  %372 = vmatprep.subr.bf16.mxu0 0
  %373 = vmatpush1.bf16.msra.mxu0 0
  %374 = vmatprep.subr.bf16.mxu0 0
  %375 = vmatpush1.bf16.msra.mxu0 0
  %376 = vmatprep.subr.bf16.mxu0 0
  %377 = vmatpush1.bf16.msra.mxu0 0
  %378 = vmatprep.subr.bf16.mxu0 0
  %379 = vmatpush1.bf16.msra.mxu0 0
  %380 = vmatprep.subr.bf16.mxu0 0
  %381 = vmatpush1.bf16.msra.mxu0 0
  %382 = vmatprep.subr.bf16.mxu0 0
  %383 = vmatpush1.bf16.msra.mxu0 0
  %384 = vmatprep.subr.bf16.mxu0 0
  %385 = vmatpush1.bf16.msra.mxu0 0
  %386 = vmatprep.subr.bf16.mxu0 0
  %387 = vmatpush1.bf16.msra.mxu0 0
  %388 = vmatprep.mubr.bf16.mxu0 0
  %389 = vmatmul.mubr.bf16.gmra.mrb[0].mxu0 %v257
  %v390 = vpop.f32.mrb[0].mxu0
  %v391 = vadd.f32 %v93, %v390
  %v392 = vpop.f32.mrb[0].mxu0
  %v393 = vpop.f32.mrb[0].mxu0
  %v394 = vadd.f32 %v93, %v393
  %v395 = vpop.f32.mrb[0].mxu0
  %396 = vmatprep.mubr.bf16.mxu0 0
  %397 = vmatmul.mubr.bf16.gmra.mrb[0].mxu0 %v260
  %v398 = vpop.f32.mrb[0].mxu0
  %v399 = vadd.f32 %v93, %v398
  %v400 = vpop.f32.mrb[0].mxu0
  %v401 = vpop.f32.mrb[0].mxu0
  %v402 = vadd.f32 %v93, %v401
  %v403 = vpop.f32.mrb[0].mxu0
  %404 = vmatprep.mubr.bf16.mxu0 0
  %405 = vmatmul.mubr.bf16.gmra.mrb[0].mxu0 %v263
  %v406 = vpop.f32.mrb[0].mxu0
  %v407 = vadd.f32 %v93, %v406
  %v408 = vpop.f32.mrb[0].mxu0
  %v409 = vpop.f32.mrb[0].mxu0
  %v410 = vadd.f32 %v93, %v409
  %v411 = vpop.f32.mrb[0].mxu0
  %412 = vmatprep.mubr.bf16.mxu0 0
  %413 = vmatmul.mubr.bf16.gmra.mrb[0].mxu0 %v266
  %v414 = vpop.f32.mrb[0].mxu0
  %v415 = vadd.f32 %v93, %v414
  %v416 = vpop.f32.mrb[0].mxu0
  %v417 = vpop.f32.mrb[0].mxu0
  %v418 = vadd.f32 %v93, %v417
  %v419 = vpop.f32.mrb[0].mxu0
  %420 = vmatprep.mubr.bf16.mxu0 0
  %421 = vmatmul.mubr.bf16.gmra.mrb[0].mxu0 %v269
  %v422 = vpop.f32.mrb[0].mxu0
  %v423 = vadd.f32 %v93, %v422
  %v424 = vpop.f32.mrb[0].mxu0
  %v425 = vpop.f32.mrb[0].mxu0
  %v426 = vadd.f32 %v93, %v425
  %v427 = vpop.f32.mrb[0].mxu0
  %428 = vmatprep.mubr.bf16.mxu0 0
  %429 = vmatmul.mubr.bf16.gmra.mrb[0].mxu0 %v272
  %v430 = vpop.f32.mrb[0].mxu0
  %v431 = vadd.f32 %v93, %v430
  %v432 = vpop.f32.mrb[0].mxu0
  %v433 = vpop.f32.mrb[0].mxu0
  %v434 = vadd.f32 %v93, %v433
  %v435 = vpop.f32.mrb[0].mxu0
  %436 = vmatprep.mubr.bf16.mxu0 0
  %437 = vmatmul.mubr.bf16.gmra.mrb[0].mxu0 %v275
  %v438 = vpop.f32.mrb[0].mxu0
  %v439 = vadd.f32 %v93, %v438
  %v440 = vpop.f32.mrb[0].mxu0
  %v441 = vpop.f32.mrb[0].mxu0
  %v442 = vadd.f32 %v93, %v441
  %v443 = vpop.f32.mrb[0].mxu0
  %444 = vmatprep.mubr.bf16.mxu0 0
  %445 = vmatmul.mubr.bf16.gmra.mrb[0].mxu0 %v278
  %v446 = vpop.f32.mrb[0].mxu0
  %v447 = vadd.f32 %v93, %v446
  %v448 = vpop.f32.mrb[0].mxu0
  %v449 = vpop.f32.mrb[0].mxu0
  %v450 = vadd.f32 %v93, %v449
  %v451 = vpop.f32.mrb[0].mxu0
  %452 = vmatprep.mubr.bf16.mxu0 0
  %453 = vmatmul.mubr.bf16.gmra.mrb[0].mxu0 %v281
  %v454 = vpop.f32.mrb[0].mxu0
  %v455 = vadd.f32 %v93, %v454
  %v456 = vpop.f32.mrb[0].mxu0
  %v457 = vpop.f32.mrb[0].mxu0
  %v458 = vadd.f32 %v93, %v457
  %v459 = vpop.f32.mrb[0].mxu0
  %460 = vmatprep.mubr.bf16.mxu0 0
  %461 = vmatmul.mubr.bf16.gmra.mrb[0].mxu0 %v284
  %v462 = vpop.f32.mrb[0].mxu0
  %v463 = vadd.f32 %v93, %v462
  %v464 = vpop.f32.mrb[0].mxu0
  %v465 = vpop.f32.mrb[0].mxu0
  %v466 = vadd.f32 %v93, %v465
  %v467 = vpop.f32.mrb[0].mxu0
  %468 = vmatprep.mubr.bf16.mxu0 0
  %469 = vmatmul.mubr.bf16.gmra.mrb[0].mxu0 %v287
  %v470 = vpop.f32.mrb[0].mxu0
  %v471 = vadd.f32 %v93, %v470
  %v472 = vpop.f32.mrb[0].mxu0
  %v473 = vpop.f32.mrb[0].mxu0
  %v474 = vadd.f32 %v93, %v473
  %v475 = vpop.f32.mrb[0].mxu0
  %476 = vmatprep.mubr.bf16.mxu0 0
  %477 = vmatmul.mubr.bf16.gmra.mrb[0].mxu0 %v290
  %v478 = vpop.f32.mrb[0].mxu0
  %v479 = vadd.f32 %v93, %v478
  %v480 = vpop.f32.mrb[0].mxu0
  %v481 = vpop.f32.mrb[0].mxu0
  %v482 = vadd.f32 %v93, %v481
  %v483 = vpop.f32.mrb[0].mxu0
  %484 = vmatprep.mubr.bf16.mxu0 0
  %485 = vmatmul.mubr.bf16.gmra.mrb[0].mxu0 %v293
  %v486 = vpop.f32.mrb[0].mxu0
  %v487 = vadd.f32 %v93, %v486
  %v488 = vpop.f32.mrb[0].mxu0
  %v489 = vpop.f32.mrb[0].mxu0
  %v490 = vadd.f32 %v93, %v489
  %v491 = vpop.f32.mrb[0].mxu0
  %492 = vmatprep.mubr.bf16.mxu0 0
  %493 = vmatmul.mubr.bf16.gmra.mrb[0].mxu0 %v296
  %v494 = vpop.f32.mrb[0].mxu0
  %v495 = vadd.f32 %v93, %v494
  %v496 = vpop.f32.mrb[0].mxu0
  %v497 = vpop.f32.mrb[0].mxu0
  %v498 = vadd.f32 %v93, %v497
  %v499 = vpop.f32.mrb[0].mxu0
  %500 = vmatprep.mubr.bf16.mxu0 0
  %501 = vmatmul.mubr.bf16.gmra.mrb[0].mxu0 %v299
  %v502 = vpop.f32.mrb[0].mxu0
  %v503 = vadd.f32 %v93, %v502
  %v504 = vpop.f32.mrb[0].mxu0
  %v505 = vpop.f32.mrb[0].mxu0
  %v506 = vadd.f32 %v93, %v505
  %v507 = vpop.f32.mrb[0].mxu0
  %508 = vmatprep.mubr.bf16.mxu0 0
  %509 = vmatmul.mubr.bf16.gmra.mrb[0].mxu0 %v302
  %v510 = vpop.f32.mrb[0].mxu0
  %v511 = vadd.f32 %v93, %v510
  %v512 = vpop.f32.mrb[0].mxu0
  %v513 = vpop.f32.mrb[0].mxu0
  %v514 = vadd.f32 %v93, %v513
  %v515 = vpop.f32.mrb[0].mxu0
  %516 = vmatprep.mubr.bf16.mxu0 0
  %517 = vmatmul.mubr.bf16.gmra.mrb[0].mxu0 %v305
  %v518 = vpop.f32.mrb[0].mxu0
  %v519 = vadd.f32 %v93, %v518
  %v520 = vpop.f32.mrb[0].mxu0
  %v521 = vpop.f32.mrb[0].mxu0
  %v522 = vadd.f32 %v93, %v521
  %v523 = vpop.f32.mrb[0].mxu0
  %524 = vmatprep.mubr.bf16.mxu0 0
  %525 = vmatmul.mubr.bf16.gmra.mrb[0].mxu0 %v308
  %v526 = vpop.f32.mrb[0].mxu0
  %v527 = vadd.f32 %v93, %v526
  %v528 = vpop.f32.mrb[0].mxu0
  %v529 = vpop.f32.mrb[0].mxu0
  %v530 = vadd.f32 %v93, %v529
  %v531 = vpop.f32.mrb[0].mxu0
  %532 = vmatprep.mubr.bf16.mxu0 0
  %533 = vmatmul.mubr.bf16.gmra.mrb[0].mxu0 %v311
  %v534 = vpop.f32.mrb[0].mxu0
  %v535 = vadd.f32 %v93, %v534
  %v536 = vpop.f32.mrb[0].mxu0
  %v537 = vpop.f32.mrb[0].mxu0
  %v538 = vadd.f32 %v93, %v537
  %v539 = vpop.f32.mrb[0].mxu0
  %540 = vmatprep.mubr.bf16.mxu0 0
  %541 = vmatmul.mubr.bf16.gmra.mrb[0].mxu0 %v314
  %v542 = vpop.f32.mrb[0].mxu0
  %v543 = vadd.f32 %v93, %v542
  %v544 = vpop.f32.mrb[0].mxu0
  %v545 = vpop.f32.mrb[0].mxu0
  %v546 = vadd.f32 %v93, %v545
  %v547 = vpop.f32.mrb[0].mxu0
  %548 = vmatprep.mubr.bf16.mxu0 0
  %549 = vmatmul.mubr.bf16.gmra.mrb[0].mxu0 %v317
  %v550 = vpop.f32.mrb[0].mxu0
  %v551 = vadd.f32 %v93, %v550
  %v552 = vpop.f32.mrb[0].mxu0
  %v553 = vpop.f32.mrb[0].mxu0
  %v554 = vadd.f32 %v93, %v553
  %v555 = vpop.f32.mrb[0].mxu0
  %556 = vmatprep.mubr.bf16.mxu0 0
  %557 = vmatmul.mubr.bf16.gmra.mrb[0].mxu0 %v320
  %v558 = vpop.f32.mrb[0].mxu0
  %v559 = vadd.f32 %v93, %v558
  %v560 = vpop.f32.mrb[0].mxu0
  %v561 = vpop.f32.mrb[0].mxu0
  %v562 = vadd.f32 %v93, %v561
  %v563 = vpop.f32.mrb[0].mxu0
  %564 = vmatprep.mubr.bf16.mxu0 0
  %565 = vmatmul.mubr.bf16.gmra.mrb[0].mxu0 %v323
  %v566 = vpop.f32.mrb[0].mxu0
  %v567 = vadd.f32 %v93, %v566
  %v568 = vpop.f32.mrb[0].mxu0
  %v569 = vpop.f32.mrb[0].mxu0
  %v570 = vadd.f32 %v93, %v569
  %v571 = vpop.f32.mrb[0].mxu0
  %572 = vmatprep.mubr.bf16.mxu0 0
  %573 = vmatmul.mubr.bf16.gmra.mrb[0].mxu0 %v326
  %v574 = vpop.f32.mrb[0].mxu0
  %v575 = vadd.f32 %v93, %v574
  %v576 = vpop.f32.mrb[0].mxu0
  %v577 = vpop.f32.mrb[0].mxu0
  %v578 = vadd.f32 %v93, %v577
  %v579 = vpop.f32.mrb[0].mxu0
  %580 = vmatprep.mubr.bf16.mxu0 0
  %581 = vmatmul.mubr.bf16.gmra.mrb[0].mxu0 %v329
  %v582 = vpop.f32.mrb[0].mxu0
  %v583 = vadd.f32 %v93, %v582
  %v584 = vpop.f32.mrb[0].mxu0
  %v585 = vpop.f32.mrb[0].mxu0
  %v586 = vadd.f32 %v93, %v585
  %v587 = vpop.f32.mrb[0].mxu0
  %588 = vmatprep.mubr.bf16.mxu0 0
  %589 = vmatmul.mubr.bf16.gmra.mrb[0].mxu0 %v332
  %v590 = vpop.f32.mrb[0].mxu0
  %v591 = vadd.f32 %v93, %v590
  %v592 = vpop.f32.mrb[0].mxu0
  %v593 = vpop.f32.mrb[0].mxu0
  %v594 = vadd.f32 %v93, %v593
  %v595 = vpop.f32.mrb[0].mxu0
  %596 = vmatprep.mubr.bf16.mxu0 0
  %597 = vmatmul.mubr.bf16.gmra.mrb[0].mxu0 %v335
  %v598 = vpop.f32.mrb[0].mxu0
  %v599 = vadd.f32 %v93, %v598
  %v600 = vpop.f32.mrb[0].mxu0
  %v601 = vpop.f32.mrb[0].mxu0
  %v602 = vadd.f32 %v93, %v601
  %v603 = vpop.f32.mrb[0].mxu0
  %604 = vmatprep.mubr.bf16.mxu0 0
  %605 = vmatmul.mubr.bf16.gmra.mrb[0].mxu0 %v338
  %v606 = vpop.f32.mrb[0].mxu0
  %v607 = vadd.f32 %v93, %v606
  %v608 = vpop.f32.mrb[0].mxu0
  %v609 = vpop.f32.mrb[0].mxu0
  %v610 = vadd.f32 %v93, %v609
  %v611 = vpop.f32.mrb[0].mxu0
  %612 = vmatprep.mubr.bf16.mxu0 0
  %613 = vmatmul.mubr.bf16.gmra.mrb[0].mxu0 %v341
  %v614 = vpop.f32.mrb[0].mxu0
  %v615 = vadd.f32 %v93, %v614
  %v616 = vpop.f32.mrb[0].mxu0
  %v617 = vpop.f32.mrb[0].mxu0
  %v618 = vadd.f32 %v93, %v617
  %v619 = vpop.f32.mrb[0].mxu0
  %620 = vmatprep.mubr.bf16.mxu0 0
  %621 = vmatmul.mubr.bf16.gmra.mrb[0].mxu0 %v344
  %v622 = vpop.f32.mrb[0].mxu0
  %v623 = vadd.f32 %v93, %v622
  %v624 = vpop.f32.mrb[0].mxu0
  %v625 = vpop.f32.mrb[0].mxu0
  %v626 = vadd.f32 %v93, %v625
  %v627 = vpop.f32.mrb[0].mxu0
  %628 = vmatprep.mubr.bf16.mxu0 0
  %629 = vmatmul.mubr.bf16.gmra.mrb[0].mxu0 %v347
  %v630 = vpop.f32.mrb[0].mxu0
  %v631 = vadd.f32 %v93, %v630
  %v632 = vpop.f32.mrb[0].mxu0
  %v633 = vpop.f32.mrb[0].mxu0
  %v634 = vadd.f32 %v93, %v633
  %v635 = vpop.f32.mrb[0].mxu0
  %636 = vmatprep.mubr.bf16.mxu0 0
  %637 = vmatmul.mubr.bf16.gmra.mrb[0].mxu0 %v350
  %v638 = vpop.f32.mrb[0].mxu0
  %v639 = vadd.f32 %v93, %v638
  %v640 = vpop.f32.mrb[0].mxu0
  %v641 = vpop.f32.mrb[0].mxu0
  %v642 = vadd.f32 %v93, %v641
  %v643 = vpop.f32.mrb[0].mxu0
  %644 = vdwg.mxu0
  %v645 = vld [vmem:[%s3] sm:$0x3]
  %v646 = vld [vmem:[%s4] sm:$0x1]
  %v648 = vlaneseq
  %v649 = vshrl.u32 %v648, 7
  %v650 = vsub.s32 0, %v649
  %v651 = vrot.slane %v646, %v650
  %v654 = vsel %vm352, %v645, 0
  %656 = vmatprep.subr.bf16.mxu0 0
  %657 = vmatpush1.bf16.msra.mxu0 %v654
  %658 = vmatprep.subr.bf16.mxu0 0
  %659 = vmatpush1.bf16.msra.mxu0 0
  %660 = vmatprep.subr.bf16.mxu0 0
  %661 = vmatpush1.bf16.msra.mxu0 0
  %662 = vmatprep.subr.bf16.mxu0 0
  %663 = vmatpush1.bf16.msra.mxu0 0
  %664 = vmatprep.subr.bf16.mxu0 0
  %665 = vmatpush1.bf16.msra.mxu0 0
  %666 = vmatprep.subr.bf16.mxu0 0
  %667 = vmatpush1.bf16.msra.mxu0 0
  %668 = vmatprep.subr.bf16.mxu0 0
  %669 = vmatpush1.bf16.msra.mxu0 0
  %670 = vmatprep.subr.bf16.mxu0 0
  %671 = vmatpush1.bf16.msra.mxu0 0
  %672 = vmatprep.subr.bf16.mxu0 0
  %673 = vmatpush1.bf16.msra.mxu0 0
  %674 = vmatprep.subr.bf16.mxu0 0
  %675 = vmatpush1.bf16.msra.mxu0 0
  %676 = vmatprep.subr.bf16.mxu0 0
  %677 = vmatpush1.bf16.msra.mxu0 0
  %678 = vmatprep.subr.bf16.mxu0 0
  %679 = vmatpush1.bf16.msra.mxu0 0
  %680 = vmatprep.subr.bf16.mxu0 0
  %681 = vmatpush1.bf16.msra.mxu0 0
  %682 = vmatprep.subr.bf16.mxu0 0
  %683 = vmatpush1.bf16.msra.mxu0 0
  %684 = vmatprep.subr.bf16.mxu0 0
  %685 = vmatpush1.bf16.msra.mxu0 0
  %686 = vmatprep.subr.bf16.mxu0 0
  %687 = vmatpush1.bf16.msra.mxu0 0
  %688 = vmatprep.mubr.bf16.mxu0 0
  %689 = vmatmul.mubr.bf16.gmra.mrb[0].mxu0 %v257
  %v690 = vpop.f32.mrb[0].mxu0
  %v691 = vadd.f32 %v651, %v690
  %v692 = vpop.f32.mrb[0].mxu0
  %v693 = vpop.f32.mrb[0].mxu0
  %v694 = vadd.f32 %v651, %v693
  %v695 = vpop.f32.mrb[0].mxu0
  %696 = vmatprep.mubr.bf16.mxu0 0
  %697 = vmatmul.mubr.bf16.gmra.mrb[0].mxu0 %v260
  %v698 = vpop.f32.mrb[0].mxu0
  %v699 = vadd.f32 %v651, %v698
  %v700 = vpop.f32.mrb[0].mxu0
  %v701 = vpop.f32.mrb[0].mxu0
  %v702 = vadd.f32 %v651, %v701
  %v703 = vpop.f32.mrb[0].mxu0
  %704 = vmatprep.mubr.bf16.mxu0 0
  %705 = vmatmul.mubr.bf16.gmra.mrb[0].mxu0 %v263
  %v706 = vpop.f32.mrb[0].mxu0
  %v707 = vadd.f32 %v651, %v706
  %v708 = vpop.f32.mrb[0].mxu0
  %v709 = vpop.f32.mrb[0].mxu0
  %v710 = vadd.f32 %v651, %v709
  %v711 = vpop.f32.mrb[0].mxu0
  %712 = vmatprep.mubr.bf16.mxu0 0
  %713 = vmatmul.mubr.bf16.gmra.mrb[0].mxu0 %v266
  %v714 = vpop.f32.mrb[0].mxu0
  %v715 = vadd.f32 %v651, %v714
  %v716 = vpop.f32.mrb[0].mxu0
  %v717 = vpop.f32.mrb[0].mxu0
  %v718 = vadd.f32 %v651, %v717
  %v719 = vpop.f32.mrb[0].mxu0
  %720 = vmatprep.mubr.bf16.mxu0 0
  %721 = vmatmul.mubr.bf16.gmra.mrb[0].mxu0 %v269
  %v722 = vpop.f32.mrb[0].mxu0
  %v723 = vadd.f32 %v651, %v722
  %v724 = vpop.f32.mrb[0].mxu0
  %v725 = vpop.f32.mrb[0].mxu0
  %v726 = vadd.f32 %v651, %v725
  %v727 = vpop.f32.mrb[0].mxu0
  %728 = vmatprep.mubr.bf16.mxu0 0
  %729 = vmatmul.mubr.bf16.gmra.mrb[0].mxu0 %v272
  %v730 = vpop.f32.mrb[0].mxu0
  %v731 = vadd.f32 %v651, %v730
  %v732 = vpop.f32.mrb[0].mxu0
  %v733 = vpop.f32.mrb[0].mxu0
  %v734 = vadd.f32 %v651, %v733
  %v735 = vpop.f32.mrb[0].mxu0
  %736 = vmatprep.mubr.bf16.mxu0 0
  %737 = vmatmul.mubr.bf16.gmra.mrb[0].mxu0 %v275
  %v738 = vpop.f32.mrb[0].mxu0
  %v739 = vadd.f32 %v651, %v738
  %v740 = vpop.f32.mrb[0].mxu0
  %v741 = vpop.f32.mrb[0].mxu0
  %v742 = vadd.f32 %v651, %v741
  %v743 = vpop.f32.mrb[0].mxu0
  %744 = vmatprep.mubr.bf16.mxu0 0
  %745 = vmatmul.mubr.bf16.gmra.mrb[0].mxu0 %v278
  %v746 = vpop.f32.mrb[0].mxu0
  %v747 = vadd.f32 %v651, %v746
  %v748 = vpop.f32.mrb[0].mxu0
  %v749 = vpop.f32.mrb[0].mxu0
  %v750 = vadd.f32 %v651, %v749
  %v751 = vpop.f32.mrb[0].mxu0
  %752 = vmatprep.mubr.bf16.mxu0 0
  %753 = vmatmul.mubr.bf16.gmra.mrb[0].mxu0 %v281
  %v754 = vpop.f32.mrb[0].mxu0
  %v755 = vadd.f32 %v651, %v754
  %v756 = vpop.f32.mrb[0].mxu0
  %v757 = vpop.f32.mrb[0].mxu0
  %v758 = vadd.f32 %v651, %v757
  %v759 = vpop.f32.mrb[0].mxu0
  %760 = vmatprep.mubr.bf16.mxu0 0
  %761 = vmatmul.mubr.bf16.gmra.mrb[0].mxu0 %v284
  %v762 = vpop.f32.mrb[0].mxu0
  %v763 = vadd.f32 %v651, %v762
  %v764 = vpop.f32.mrb[0].mxu0
  %v765 = vpop.f32.mrb[0].mxu0
  %v766 = vadd.f32 %v651, %v765
  %v767 = vpop.f32.mrb[0].mxu0
  %768 = vmatprep.mubr.bf16.mxu0 0
  %769 = vmatmul.mubr.bf16.gmra.mrb[0].mxu0 %v287
  %v770 = vpop.f32.mrb[0].mxu0
  %v771 = vadd.f32 %v651, %v770
  %v772 = vpop.f32.mrb[0].mxu0
  %v773 = vpop.f32.mrb[0].mxu0
  %v774 = vadd.f32 %v651, %v773
  %v775 = vpop.f32.mrb[0].mxu0
  %776 = vmatprep.mubr.bf16.mxu0 0
  %777 = vmatmul.mubr.bf16.gmra.mrb[0].mxu0 %v290
  %v778 = vpop.f32.mrb[0].mxu0
  %v779 = vadd.f32 %v651, %v778
  %v780 = vpop.f32.mrb[0].mxu0
  %v781 = vpop.f32.mrb[0].mxu0
  %v782 = vadd.f32 %v651, %v781
  %v783 = vpop.f32.mrb[0].mxu0
  %784 = vmatprep.mubr.bf16.mxu0 0
  %785 = vmatmul.mubr.bf16.gmra.mrb[0].mxu0 %v293
  %v786 = vpop.f32.mrb[0].mxu0
  %v787 = vadd.f32 %v651, %v786
  %v788 = vpop.f32.mrb[0].mxu0
  %v789 = vpop.f32.mrb[0].mxu0
  %v790 = vadd.f32 %v651, %v789
  %v791 = vpop.f32.mrb[0].mxu0
  %792 = vmatprep.mubr.bf16.mxu0 0
  %793 = vmatmul.mubr.bf16.gmra.mrb[0].mxu0 %v296
  %v794 = vpop.f32.mrb[0].mxu0
  %v795 = vadd.f32 %v651, %v794
  %v796 = vpop.f32.mrb[0].mxu0
  %v797 = vpop.f32.mrb[0].mxu0
  %v798 = vadd.f32 %v651, %v797
  %v799 = vpop.f32.mrb[0].mxu0
  %800 = vmatprep.mubr.bf16.mxu0 0
  %801 = vmatmul.mubr.bf16.gmra.mrb[0].mxu0 %v299
  %v802 = vpop.f32.mrb[0].mxu0
  %v803 = vadd.f32 %v651, %v802
  %v804 = vpop.f32.mrb[0].mxu0
  %v805 = vpop.f32.mrb[0].mxu0
  %v806 = vadd.f32 %v651, %v805
  %v807 = vpop.f32.mrb[0].mxu0
  %808 = vmatprep.mubr.bf16.mxu0 0
  %809 = vmatmul.mubr.bf16.gmra.mrb[0].mxu0 %v302
  %v810 = vpop.f32.mrb[0].mxu0
  %v811 = vadd.f32 %v651, %v810
  %v812 = vpop.f32.mrb[0].mxu0
  %v813 = vpop.f32.mrb[0].mxu0
  %v814 = vadd.f32 %v651, %v813
  %v815 = vpop.f32.mrb[0].mxu0
  %816 = vmatprep.mubr.bf16.mxu0 0
  %817 = vmatmul.mubr.bf16.gmra.mrb[0].mxu0 %v305
  %v818 = vpop.f32.mrb[0].mxu0
  %v819 = vadd.f32 %v651, %v818
  %v820 = vpop.f32.mrb[0].mxu0
  %v821 = vpop.f32.mrb[0].mxu0
  %v822 = vadd.f32 %v651, %v821
  %v823 = vpop.f32.mrb[0].mxu0
  %824 = vmatprep.mubr.bf16.mxu0 0
  %825 = vmatmul.mubr.bf16.gmra.mrb[0].mxu0 %v308
  %v826 = vpop.f32.mrb[0].mxu0
  %v827 = vadd.f32 %v651, %v826
  %v828 = vpop.f32.mrb[0].mxu0
  %v829 = vpop.f32.mrb[0].mxu0
  %v830 = vadd.f32 %v651, %v829
  %v831 = vpop.f32.mrb[0].mxu0
  %832 = vmatprep.mubr.bf16.mxu0 0
  %833 = vmatmul.mubr.bf16.gmra.mrb[0].mxu0 %v311
  %v834 = vpop.f32.mrb[0].mxu0
  %v835 = vadd.f32 %v651, %v834
  %v836 = vpop.f32.mrb[0].mxu0
  %v837 = vpop.f32.mrb[0].mxu0
  %v838 = vadd.f32 %v651, %v837
  %v839 = vpop.f32.mrb[0].mxu0
  %840 = vmatprep.mubr.bf16.mxu0 0
  %841 = vmatmul.mubr.bf16.gmra.mrb[0].mxu0 %v314
  %v842 = vpop.f32.mrb[0].mxu0
  %v843 = vadd.f32 %v651, %v842
  %v844 = vpop.f32.mrb[0].mxu0
  %v845 = vpop.f32.mrb[0].mxu0
  %v846 = vadd.f32 %v651, %v845
  %v847 = vpop.f32.mrb[0].mxu0
  %848 = vmatprep.mubr.bf16.mxu0 0
  %849 = vmatmul.mubr.bf16.gmra.mrb[0].mxu0 %v317
  %v850 = vpop.f32.mrb[0].mxu0
  %v851 = vadd.f32 %v651, %v850
  %v852 = vpop.f32.mrb[0].mxu0
  %v853 = vpop.f32.mrb[0].mxu0
  %v854 = vadd.f32 %v651, %v853
  %v855 = vpop.f32.mrb[0].mxu0
  %856 = vmatprep.mubr.bf16.mxu0 0
  %857 = vmatmul.mubr.bf16.gmra.mrb[0].mxu0 %v320
  %v858 = vpop.f32.mrb[0].mxu0
  %v859 = vadd.f32 %v651, %v858
  %v860 = vpop.f32.mrb[0].mxu0
  %v861 = vpop.f32.mrb[0].mxu0
  %v862 = vadd.f32 %v651, %v861
  %v863 = vpop.f32.mrb[0].mxu0
  %864 = vmatprep.mubr.bf16.mxu0 0
  %865 = vmatmul.mubr.bf16.gmra.mrb[0].mxu0 %v323
  %v866 = vpop.f32.mrb[0].mxu0
  %v867 = vadd.f32 %v651, %v866
  %v868 = vpop.f32.mrb[0].mxu0
  %v869 = vpop.f32.mrb[0].mxu0
  %v870 = vadd.f32 %v651, %v869
  %v871 = vpop.f32.mrb[0].mxu0
  %872 = vmatprep.mubr.bf16.mxu0 0
  %873 = vmatmul.mubr.bf16.gmra.mrb[0].mxu0 %v326
  %v874 = vpop.f32.mrb[0].mxu0
  %v875 = vadd.f32 %v651, %v874
  %v876 = vpop.f32.mrb[0].mxu0
  %v877 = vpop.f32.mrb[0].mxu0
  %v878 = vadd.f32 %v651, %v877
  %v879 = vpop.f32.mrb[0].mxu0
  %880 = vmatprep.mubr.bf16.mxu0 0
  %881 = vmatmul.mubr.bf16.gmra.mrb[0].mxu0 %v329
  %v882 = vpop.f32.mrb[0].mxu0
  %v883 = vadd.f32 %v651, %v882
  %v884 = vpop.f32.mrb[0].mxu0
  %v885 = vpop.f32.mrb[0].mxu0
  %v886 = vadd.f32 %v651, %v885
  %v887 = vpop.f32.mrb[0].mxu0
  %888 = vmatprep.mubr.bf16.mxu0 0
  %889 = vmatmul.mubr.bf16.gmra.mrb[0].mxu0 %v332
  %v890 = vpop.f32.mrb[0].mxu0
  %v891 = vadd.f32 %v651, %v890
  %v892 = vpop.f32.mrb[0].mxu0
  %v893 = vpop.f32.mrb[0].mxu0
  %v894 = vadd.f32 %v651, %v893
  %v895 = vpop.f32.mrb[0].mxu0
  %896 = vmatprep.mubr.bf16.mxu0 0
  %897 = vmatmul.mubr.bf16.gmra.mrb[0].mxu0 %v335
  %v898 = vpop.f32.mrb[0].mxu0
  %v899 = vadd.f32 %v651, %v898
  %v900 = vpop.f32.mrb[0].mxu0
  %v901 = vpop.f32.mrb[0].mxu0
  %v902 = vadd.f32 %v651, %v901
  %v903 = vpop.f32.mrb[0].mxu0
  %904 = vmatprep.mubr.bf16.mxu0 0
  %905 = vmatmul.mubr.bf16.gmra.mrb[0].mxu0 %v338
  %v906 = vpop.f32.mrb[0].mxu0
  %v907 = vadd.f32 %v651, %v906
  %v908 = vpop.f32.mrb[0].mxu0
  %v909 = vpop.f32.mrb[0].mxu0
  %v910 = vadd.f32 %v651, %v909
  %v911 = vpop.f32.mrb[0].mxu0
  %912 = vmatprep.mubr.bf16.mxu0 0
  %913 = vmatmul.mubr.bf16.gmra.mrb[0].mxu0 %v341
  %v914 = vpop.f32.mrb[0].mxu0
  %v915 = vadd.f32 %v651, %v914
  %v916 = vpop.f32.mrb[0].mxu0
  %v917 = vpop.f32.mrb[0].mxu0
  %v918 = vadd.f32 %v651, %v917
  %v919 = vpop.f32.mrb[0].mxu0
  %920 = vmatprep.mubr.bf16.mxu0 0
  %921 = vmatmul.mubr.bf16.gmra.mrb[0].mxu0 %v344
  %v922 = vpop.f32.mrb[0].mxu0
  %v923 = vadd.f32 %v651, %v922
  %v924 = vpop.f32.mrb[0].mxu0
  %v925 = vpop.f32.mrb[0].mxu0
  %v926 = vadd.f32 %v651, %v925
  %v927 = vpop.f32.mrb[0].mxu0
  %928 = vmatprep.mubr.bf16.mxu0 0
  %929 = vmatmul.mubr.bf16.gmra.mrb[0].mxu0 %v347
  %v930 = vpop.f32.mrb[0].mxu0
  %v931 = vadd.f32 %v651, %v930
  %v932 = vpop.f32.mrb[0].mxu0
  %v933 = vpop.f32.mrb[0].mxu0
  %v934 = vadd.f32 %v651, %v933
  %v935 = vpop.f32.mrb[0].mxu0
  %936 = vmatprep.mubr.bf16.mxu0 0
  %937 = vmatmul.mubr.bf16.gmra.mrb[0].mxu0 %v350
  %v938 = vpop.f32.mrb[0].mxu0
  %v939 = vadd.f32 %v651, %v938
  %v940 = vpop.f32.mrb[0].mxu0
  %v941 = vpop.f32.mrb[0].mxu0
  %v942 = vadd.f32 %v651, %v941
  %v943 = vpop.f32.mrb[0].mxu0
  %944 = vdwg.mxu0
  %v945 = vsub.f32 0.0, %v391
  %v946 = vsub.f32 0.0, %v394
  %v947 = vsub.f32 0.0, %v399
  %v948 = vsub.f32 0.0, %v402
  %v949 = vsub.f32 0.0, %v407
  %v950 = vsub.f32 0.0, %v410
  %v951 = vsub.f32 0.0, %v415
  %v952 = vsub.f32 0.0, %v418
  %v953 = vsub.f32 0.0, %v423
  %v954 = vsub.f32 0.0, %v426
  %v955 = vsub.f32 0.0, %v431
  %v956 = vsub.f32 0.0, %v434
  %v957 = vsub.f32 0.0, %v439
  %v958 = vsub.f32 0.0, %v442
  %v959 = vsub.f32 0.0, %v447
  %v960 = vsub.f32 0.0, %v450
  %v961 = vsub.f32 0.0, %v455
  %v962 = vsub.f32 0.0, %v458
  %v963 = vsub.f32 0.0, %v463
  %v964 = vsub.f32 0.0, %v466
  %v965 = vsub.f32 0.0, %v471
  %v966 = vsub.f32 0.0, %v474
  %v967 = vsub.f32 0.0, %v479
  %v968 = vsub.f32 0.0, %v482
  %v969 = vsub.f32 0.0, %v487
  %v970 = vsub.f32 0.0, %v490
  %v971 = vsub.f32 0.0, %v495
  %v972 = vsub.f32 0.0, %v498
  %v973 = vsub.f32 0.0, %v503
  %v974 = vsub.f32 0.0, %v506
  %v975 = vsub.f32 0.0, %v511
  %v976 = vsub.f32 0.0, %v514
  %v977 = vsub.f32 0.0, %v519
  %v978 = vsub.f32 0.0, %v522
  %v979 = vsub.f32 0.0, %v527
  %v980 = vsub.f32 0.0, %v530
  %v981 = vsub.f32 0.0, %v535
  %v982 = vsub.f32 0.0, %v538
  %v983 = vsub.f32 0.0, %v543
  %v984 = vsub.f32 0.0, %v546
  %v985 = vsub.f32 0.0, %v551
  %v986 = vsub.f32 0.0, %v554
  %v987 = vsub.f32 0.0, %v559
  %v988 = vsub.f32 0.0, %v562
  %v989 = vsub.f32 0.0, %v567
  %v990 = vsub.f32 0.0, %v570
  %v991 = vsub.f32 0.0, %v575
  %v992 = vsub.f32 0.0, %v578
  %v993 = vsub.f32 0.0, %v583
  %v994 = vsub.f32 0.0, %v586
  %v995 = vsub.f32 0.0, %v591
  %v996 = vsub.f32 0.0, %v594
  %v997 = vsub.f32 0.0, %v599
  %v998 = vsub.f32 0.0, %v602
  %v999 = vsub.f32 0.0, %v607
  %v1000 = vsub.f32 0.0, %v610
  %v1001 = vsub.f32 0.0, %v615
  %v1002 = vsub.f32 0.0, %v618
  %v1003 = vsub.f32 0.0, %v623
  %v1004 = vsub.f32 0.0, %v626
  %v1005 = vsub.f32 0.0, %v631
  %v1006 = vsub.f32 0.0, %v634
  %v1007 = vsub.f32 0.0, %v639
  %v1008 = vsub.f32 0.0, %v642
  %v1009 = vmul.f32 %v945, 1.442695
  %v1010 = vpow.pop %v1009
  %v1011 = vmul.f32 %v946, 1.442695
  %v1012 = vpow.pop %v1011
  %v1013 = vmul.f32 %v947, 1.442695
  %v1014 = vpow.pop %v1013
  %v1015 = vmul.f32 %v948, 1.442695
  %v1016 = vpow.pop %v1015
  %v1017 = vmul.f32 %v949, 1.442695
  %v1018 = vpow.pop %v1017
  %v1019 = vmul.f32 %v950, 1.442695
  %v1020 = vpow.pop %v1019
  %v1021 = vmul.f32 %v951, 1.442695
  %v1022 = vpow.pop %v1021
  %v1023 = vmul.f32 %v952, 1.442695
  %v1024 = vpow.pop %v1023
  %v1025 = vmul.f32 %v953, 1.442695
  %v1026 = vpow.pop %v1025
  %v1027 = vmul.f32 %v954, 1.442695
  %v1028 = vpow.pop %v1027
  %v1029 = vmul.f32 %v955, 1.442695
  %v1030 = vpow.pop %v1029
  %v1031 = vmul.f32 %v956, 1.442695
  %v1032 = vpow.pop %v1031
  %v1033 = vmul.f32 %v957, 1.442695
  %v1034 = vpow.pop %v1033
  %v1035 = vmul.f32 %v958, 1.442695
  %v1036 = vpow.pop %v1035
  %v1037 = vmul.f32 %v959, 1.442695
  %v1038 = vpow.pop %v1037
  %v1039 = vmul.f32 %v960, 1.442695
  %v1040 = vpow.pop %v1039
  %v1041 = vmul.f32 %v961, 1.442695
  %v1042 = vpow.pop %v1041
  %v1043 = vmul.f32 %v962, 1.442695
  %v1044 = vpow.pop %v1043
  %v1045 = vmul.f32 %v963, 1.442695
  %v1046 = vpow.pop %v1045
  %v1047 = vmul.f32 %v964, 1.442695
  %v1048 = vpow.pop %v1047
  %v1049 = vmul.f32 %v965, 1.442695
  %v1050 = vpow.pop %v1049
  %v1051 = vmul.f32 %v966, 1.442695
  %v1052 = vpow.pop %v1051
  %v1053 = vmul.f32 %v967, 1.442695
  %v1054 = vpow.pop %v1053
  %v1055 = vmul.f32 %v968, 1.442695
  %v1056 = vpow.pop %v1055
  %v1057 = vmul.f32 %v969, 1.442695
  %v1058 = vpow.pop %v1057
  %v1059 = vmul.f32 %v970, 1.442695
  %v1060 = vpow.pop %v1059
  %v1061 = vmul.f32 %v971, 1.442695
  %v1062 = vpow.pop %v1061
  %v1063 = vmul.f32 %v972, 1.442695
  %v1064 = vpow.pop %v1063
  %v1065 = vmul.f32 %v973, 1.442695
  %v1066 = vpow.pop %v1065
  %v1067 = vmul.f32 %v974, 1.442695
  %v1068 = vpow.pop %v1067
  %v1069 = vmul.f32 %v975, 1.442695
  %v1070 = vpow.pop %v1069
  %v1071 = vmul.f32 %v976, 1.442695
  %v1072 = vpow.pop %v1071
  %v1073 = vmul.f32 %v977, 1.442695
  %v1074 = vpow.pop %v1073
  %v1075 = vmul.f32 %v978, 1.442695
  %v1076 = vpow.pop %v1075
  %v1077 = vmul.f32 %v979, 1.442695
  %v1078 = vpow.pop %v1077
  %v1079 = vmul.f32 %v980, 1.442695
  %v1080 = vpow.pop %v1079
  %v1081 = vmul.f32 %v981, 1.442695
  %v1082 = vpow.pop %v1081
  %v1083 = vmul.f32 %v982, 1.442695
  %v1084 = vpow.pop %v1083
  %v1085 = vmul.f32 %v983, 1.442695
  %v1086 = vpow.pop %v1085
  %v1087 = vmul.f32 %v984, 1.442695
  %v1088 = vpow.pop %v1087
  %v1089 = vmul.f32 %v985, 1.442695
  %v1090 = vpow.pop %v1089
  %v1091 = vmul.f32 %v986, 1.442695
  %v1092 = vpow.pop %v1091
  %v1093 = vmul.f32 %v987, 1.442695
  %v1094 = vpow.pop %v1093
  %v1095 = vmul.f32 %v988, 1.442695
  %v1096 = vpow.pop %v1095
  %v1097 = vmul.f32 %v989, 1.442695
  %v1098 = vpow.pop %v1097
  %v1099 = vmul.f32 %v990, 1.442695
  %v1100 = vpow.pop %v1099
  %v1101 = vmul.f32 %v991, 1.442695
  %v1102 = vpow.pop %v1101
  %v1103 = vmul.f32 %v992, 1.442695
  %v1104 = vpow.pop %v1103
  %v1105 = vmul.f32 %v993, 1.442695
  %v1106 = vpow.pop %v1105
  %v1107 = vmul.f32 %v994, 1.442695
  %v1108 = vpow.pop %v1107
  %v1109 = vmul.f32 %v995, 1.442695
  %v1110 = vpow.pop %v1109
  %v1111 = vmul.f32 %v996, 1.442695
  %v1112 = vpow.pop %v1111
  %v1113 = vmul.f32 %v997, 1.442695
  %v1114 = vpow.pop %v1113
  %v1115 = vmul.f32 %v998, 1.442695
  %v1116 = vpow.pop %v1115
  %v1117 = vmul.f32 %v999, 1.442695
  %v1118 = vpow.pop %v1117
  %v1119 = vmul.f32 %v1000, 1.442695
  %v1120 = vpow.pop %v1119
  %v1121 = vmul.f32 %v1001, 1.442695
  %v1122 = vpow.pop %v1121
  %v1123 = vmul.f32 %v1002, 1.442695
  %v1124 = vpow.pop %v1123
  %v1125 = vmul.f32 %v1003, 1.442695
  %v1126 = vpow.pop %v1125
  %v1127 = vmul.f32 %v1004, 1.442695
  %v1128 = vpow.pop %v1127
  %v1129 = vmul.f32 %v1005, 1.442695
  %v1130 = vpow.pop %v1129
  %v1131 = vmul.f32 %v1006, 1.442695
  %v1132 = vpow.pop %v1131
  %v1133 = vmul.f32 %v1007, 1.442695
  %v1134 = vpow.pop %v1133
  %v1135 = vmul.f32 %v1008, 1.442695
  %v1136 = vpow.pop %v1135
  %v1137 = vadd.f32 %v1010, 1.0
  %v1138 = vadd.f32 %v1012, 1.0
  %v1139 = vadd.f32 %v1014, 1.0
  %v1140 = vadd.f32 %v1016, 1.0
  %v1141 = vadd.f32 %v1018, 1.0
  %v1142 = vadd.f32 %v1020, 1.0
  %v1143 = vadd.f32 %v1022, 1.0
  %v1144 = vadd.f32 %v1024, 1.0
  %v1145 = vadd.f32 %v1026, 1.0
  %v1146 = vadd.f32 %v1028, 1.0
  %v1147 = vadd.f32 %v1030, 1.0
  %v1148 = vadd.f32 %v1032, 1.0
  %v1149 = vadd.f32 %v1034, 1.0
  %v1150 = vadd.f32 %v1036, 1.0
  %v1151 = vadd.f32 %v1038, 1.0
  %v1152 = vadd.f32 %v1040, 1.0
  %v1153 = vadd.f32 %v1042, 1.0
  %v1154 = vadd.f32 %v1044, 1.0
  %v1155 = vadd.f32 %v1046, 1.0
  %v1156 = vadd.f32 %v1048, 1.0
  %v1157 = vadd.f32 %v1050, 1.0
  %v1158 = vadd.f32 %v1052, 1.0
  %v1159 = vadd.f32 %v1054, 1.0
  %v1160 = vadd.f32 %v1056, 1.0
  %v1161 = vadd.f32 %v1058, 1.0
  %v1162 = vadd.f32 %v1060, 1.0
  %v1163 = vadd.f32 %v1062, 1.0
  %v1164 = vadd.f32 %v1064, 1.0
  %v1165 = vadd.f32 %v1066, 1.0
  %v1166 = vadd.f32 %v1068, 1.0
  %v1167 = vadd.f32 %v1070, 1.0
  %v1168 = vadd.f32 %v1072, 1.0
  %v1169 = vadd.f32 %v1074, 1.0
  %v1170 = vadd.f32 %v1076, 1.0
  %v1171 = vadd.f32 %v1078, 1.0
  %v1172 = vadd.f32 %v1080, 1.0
  %v1173 = vadd.f32 %v1082, 1.0
  %v1174 = vadd.f32 %v1084, 1.0
  %v1175 = vadd.f32 %v1086, 1.0
  %v1176 = vadd.f32 %v1088, 1.0
  %v1177 = vadd.f32 %v1090, 1.0
  %v1178 = vadd.f32 %v1092, 1.0
  %v1179 = vadd.f32 %v1094, 1.0
  %v1180 = vadd.f32 %v1096, 1.0
  %v1181 = vadd.f32 %v1098, 1.0
  %v1182 = vadd.f32 %v1100, 1.0
  %v1183 = vadd.f32 %v1102, 1.0
  %v1184 = vadd.f32 %v1104, 1.0
  %v1185 = vadd.f32 %v1106, 1.0
  %v1186 = vadd.f32 %v1108, 1.0
  %v1187 = vadd.f32 %v1110, 1.0
  %v1188 = vadd.f32 %v1112, 1.0
  %v1189 = vadd.f32 %v1114, 1.0
  %v1190 = vadd.f32 %v1116, 1.0
  %v1191 = vadd.f32 %v1118, 1.0
  %v1192 = vadd.f32 %v1120, 1.0
  %v1193 = vadd.f32 %v1122, 1.0
  %v1194 = vadd.f32 %v1124, 1.0
  %v1195 = vadd.f32 %v1126, 1.0
  %v1196 = vadd.f32 %v1128, 1.0
  %v1197 = vadd.f32 %v1130, 1.0
  %v1198 = vadd.f32 %v1132, 1.0
  %v1199 = vadd.f32 %v1134, 1.0
  %v1200 = vadd.f32 %v1136, 1.0
  %v1201 = vrcp.pop %v1137
  %v1202 = vrcp.pop %v1138
  %v1203 = vrcp.pop %v1139
  %v1204 = vrcp.pop %v1140
  %v1205 = vrcp.pop %v1141
  %v1206 = vrcp.pop %v1142
  %v1207 = vrcp.pop %v1143
  %v1208 = vrcp.pop %v1144
  %v1209 = vrcp.pop %v1145
  %v1210 = vrcp.pop %v1146
  %v1211 = vrcp.pop %v1147
  %v1212 = vrcp.pop %v1148
  %v1213 = vrcp.pop %v1149
  %v1214 = vrcp.pop %v1150
  %v1215 = vrcp.pop %v1151
  %v1216 = vrcp.pop %v1152
  %v1217 = vrcp.pop %v1153
  %v1218 = vrcp.pop %v1154
  %v1219 = vrcp.pop %v1155
  %v1220 = vrcp.pop %v1156
  %v1221 = vrcp.pop %v1157
  %v1222 = vrcp.pop %v1158
  %v1223 = vrcp.pop %v1159
  %v1224 = vrcp.pop %v1160
  %v1225 = vrcp.pop %v1161
  %v1226 = vrcp.pop %v1162
  %v1227 = vrcp.pop %v1163
  %v1228 = vrcp.pop %v1164
  %v1229 = vrcp.pop %v1165
  %v1230 = vrcp.pop %v1166
  %v1231 = vrcp.pop %v1167
  %v1232 = vrcp.pop %v1168
  %v1233 = vrcp.pop %v1169
  %v1234 = vrcp.pop %v1170
  %v1235 = vrcp.pop %v1171
  %v1236 = vrcp.pop %v1172
  %v1237 = vrcp.pop %v1173
  %v1238 = vrcp.pop %v1174
  %v1239 = vrcp.pop %v1175
  %v1240 = vrcp.pop %v1176
  %v1241 = vrcp.pop %v1177
  %v1242 = vrcp.pop %v1178
  %v1243 = vrcp.pop %v1179
  %v1244 = vrcp.pop %v1180
  %v1245 = vrcp.pop %v1181
  %v1246 = vrcp.pop %v1182
  %v1247 = vrcp.pop %v1183
  %v1248 = vrcp.pop %v1184
  %v1249 = vrcp.pop %v1185
  %v1250 = vrcp.pop %v1186
  %v1251 = vrcp.pop %v1187
  %v1252 = vrcp.pop %v1188
  %v1253 = vrcp.pop %v1189
  %v1254 = vrcp.pop %v1190
  %v1255 = vrcp.pop %v1191
  %v1256 = vrcp.pop %v1192
  %v1257 = vrcp.pop %v1193
  %v1258 = vrcp.pop %v1194
  %v1259 = vrcp.pop %v1195
  %v1260 = vrcp.pop %v1196
  %v1261 = vrcp.pop %v1197
  %v1262 = vrcp.pop %v1198
  %v1263 = vrcp.pop %v1199
  %v1264 = vrcp.pop %v1200
  %v1265 = vmul.f32 %v391, %v1201
  %v1266 = vmul.f32 %v394, %v1202
  %v1267 = vmul.f32 %v399, %v1203
  %v1268 = vmul.f32 %v402, %v1204
  %v1269 = vmul.f32 %v407, %v1205
  %v1270 = vmul.f32 %v410, %v1206
  %v1271 = vmul.f32 %v415, %v1207
  %v1272 = vmul.f32 %v418, %v1208
  %v1273 = vmul.f32 %v423, %v1209
  %v1274 = vmul.f32 %v426, %v1210
  %v1275 = vmul.f32 %v431, %v1211
  %v1276 = vmul.f32 %v434, %v1212
  %v1277 = vmul.f32 %v439, %v1213
  %v1278 = vmul.f32 %v442, %v1214
  %v1279 = vmul.f32 %v447, %v1215
  %v1280 = vmul.f32 %v450, %v1216
  %v1281 = vmul.f32 %v455, %v1217
  %v1282 = vmul.f32 %v458, %v1218
  %v1283 = vmul.f32 %v463, %v1219
  %v1284 = vmul.f32 %v466, %v1220
  %v1285 = vmul.f32 %v471, %v1221
  %v1286 = vmul.f32 %v474, %v1222
  %v1287 = vmul.f32 %v479, %v1223
  %v1288 = vmul.f32 %v482, %v1224
  %v1289 = vmul.f32 %v487, %v1225
  %v1290 = vmul.f32 %v490, %v1226
  %v1291 = vmul.f32 %v495, %v1227
  %v1292 = vmul.f32 %v498, %v1228
  %v1293 = vmul.f32 %v503, %v1229
  %v1294 = vmul.f32 %v506, %v1230
  %v1295 = vmul.f32 %v511, %v1231
  %v1296 = vmul.f32 %v514, %v1232
  %v1297 = vmul.f32 %v519, %v1233
  %v1298 = vmul.f32 %v522, %v1234
  %v1299 = vmul.f32 %v527, %v1235
  %v1300 = vmul.f32 %v530, %v1236
  %v1301 = vmul.f32 %v535, %v1237
  %v1302 = vmul.f32 %v538, %v1238
  %v1303 = vmul.f32 %v543, %v1239
  %v1304 = vmul.f32 %v546, %v1240
  %v1305 = vmul.f32 %v551, %v1241
  %v1306 = vmul.f32 %v554, %v1242
  %v1307 = vmul.f32 %v559, %v1243
  %v1308 = vmul.f32 %v562, %v1244
  %v1309 = vmul.f32 %v567, %v1245
  %v1310 = vmul.f32 %v570, %v1246
  %v1311 = vmul.f32 %v575, %v1247
  %v1312 = vmul.f32 %v578, %v1248
  %v1313 = vmul.f32 %v583, %v1249
  %v1314 = vmul.f32 %v586, %v1250
  %v1315 = vmul.f32 %v591, %v1251
  %v1316 = vmul.f32 %v594, %v1252
  %v1317 = vmul.f32 %v599, %v1253
  %v1318 = vmul.f32 %v602, %v1254
  %v1319 = vmul.f32 %v607, %v1255
  %v1320 = vmul.f32 %v610, %v1256
  %v1321 = vmul.f32 %v615, %v1257
  %v1322 = vmul.f32 %v618, %v1258
  %v1323 = vmul.f32 %v623, %v1259
  %v1324 = vmul.f32 %v626, %v1260
  %v1325 = vmul.f32 %v631, %v1261
  %v1326 = vmul.f32 %v634, %v1262
  %v1327 = vmul.f32 %v639, %v1263
  %v1328 = vmul.f32 %v642, %v1264
  %v1329 = vpack.c.bf16 %v1266, %v1265
  %v1330 = vpack.c.bf16 %v1268, %v1267
  %v1331 = vpack.c.bf16 %v1270, %v1269
  %v1332 = vpack.c.bf16 %v1272, %v1271
  %v1333 = vpack.c.bf16 %v1274, %v1273
  %v1334 = vpack.c.bf16 %v1276, %v1275
  %v1335 = vpack.c.bf16 %v1278, %v1277
  %v1336 = vpack.c.bf16 %v1280, %v1279
  %v1337 = vpack.c.bf16 %v1282, %v1281
  %v1338 = vpack.c.bf16 %v1284, %v1283
  %v1339 = vpack.c.bf16 %v1286, %v1285
  %v1340 = vpack.c.bf16 %v1288, %v1287
  %v1341 = vpack.c.bf16 %v1290, %v1289
  %v1342 = vpack.c.bf16 %v1292, %v1291
  %v1343 = vpack.c.bf16 %v1294, %v1293
  %v1344 = vpack.c.bf16 %v1296, %v1295
  %v1345 = vpack.c.bf16 %v1298, %v1297
  %v1346 = vpack.c.bf16 %v1300, %v1299
  %v1347 = vpack.c.bf16 %v1302, %v1301
  %v1348 = vpack.c.bf16 %v1304, %v1303
  %v1349 = vpack.c.bf16 %v1306, %v1305
  %v1350 = vpack.c.bf16 %v1308, %v1307
  %v1351 = vpack.c.bf16 %v1310, %v1309
  %v1352 = vpack.c.bf16 %v1312, %v1311
  %v1353 = vpack.c.bf16 %v1314, %v1313
  %v1354 = vpack.c.bf16 %v1316, %v1315
  %v1355 = vpack.c.bf16 %v1318, %v1317
  %v1356 = vpack.c.bf16 %v1320, %v1319
  %v1357 = vpack.c.bf16 %v1322, %v1321
  %v1358 = vpack.c.bf16 %v1324, %v1323
  %v1359 = vpack.c.bf16 %v1326, %v1325
  %v1360 = vpack.c.bf16 %v1328, %v1327
  %v1393 = vunpack.c.l.b16 %v1329
  %v1394 = vunpack.c.h.b16 %v1329
  %v1395 = vunpack.c.l.b16 %v1330
  %v1396 = vunpack.c.h.b16 %v1330
  %v1397 = vunpack.c.l.b16 %v1331
  %v1398 = vunpack.c.h.b16 %v1331
  %v1399 = vunpack.c.l.b16 %v1332
  %v1400 = vunpack.c.h.b16 %v1332
  %v1401 = vunpack.c.l.b16 %v1333
  %v1402 = vunpack.c.h.b16 %v1333
  %v1403 = vunpack.c.l.b16 %v1334
  %v1404 = vunpack.c.h.b16 %v1334
  %v1405 = vunpack.c.l.b16 %v1335
  %v1406 = vunpack.c.h.b16 %v1335
  %v1407 = vunpack.c.l.b16 %v1336
  %v1408 = vunpack.c.h.b16 %v1336
  %v1409 = vunpack.c.l.b16 %v1337
  %v1410 = vunpack.c.h.b16 %v1337
  %v1411 = vunpack.c.l.b16 %v1338
  %v1412 = vunpack.c.h.b16 %v1338
  %v1413 = vunpack.c.l.b16 %v1339
  %v1414 = vunpack.c.h.b16 %v1339
  %v1415 = vunpack.c.l.b16 %v1340
  %v1416 = vunpack.c.h.b16 %v1340
  %v1417 = vunpack.c.l.b16 %v1341
  %v1418 = vunpack.c.h.b16 %v1341
  %v1419 = vunpack.c.l.b16 %v1342
  %v1420 = vunpack.c.h.b16 %v1342
  %v1421 = vunpack.c.l.b16 %v1343
  %v1422 = vunpack.c.h.b16 %v1343
  %v1423 = vunpack.c.l.b16 %v1344
  %v1424 = vunpack.c.h.b16 %v1344
  %v1425 = vunpack.c.l.b16 %v1345
  %v1426 = vunpack.c.h.b16 %v1345
  %v1427 = vunpack.c.l.b16 %v1346
  %v1428 = vunpack.c.h.b16 %v1346
  %v1429 = vunpack.c.l.b16 %v1347
  %v1430 = vunpack.c.h.b16 %v1347
  %v1431 = vunpack.c.l.b16 %v1348
  %v1432 = vunpack.c.h.b16 %v1348
  %v1433 = vunpack.c.l.b16 %v1349
  %v1434 = vunpack.c.h.b16 %v1349
  %v1435 = vunpack.c.l.b16 %v1350
  %v1436 = vunpack.c.h.b16 %v1350
  %v1437 = vunpack.c.l.b16 %v1351
  %v1438 = vunpack.c.h.b16 %v1351
  %v1439 = vunpack.c.l.b16 %v1352
  %v1440 = vunpack.c.h.b16 %v1352
  %v1441 = vunpack.c.l.b16 %v1353
  %v1442 = vunpack.c.h.b16 %v1353
  %v1443 = vunpack.c.l.b16 %v1354
  %v1444 = vunpack.c.h.b16 %v1354
  %v1445 = vunpack.c.l.b16 %v1355
  %v1446 = vunpack.c.h.b16 %v1355
  %v1447 = vunpack.c.l.b16 %v1356
  %v1448 = vunpack.c.h.b16 %v1356
  %v1449 = vunpack.c.l.b16 %v1357
  %v1450 = vunpack.c.h.b16 %v1357
  %v1451 = vunpack.c.l.b16 %v1358
  %v1452 = vunpack.c.h.b16 %v1358
  %v1453 = vunpack.c.l.b16 %v1359
  %v1454 = vunpack.c.h.b16 %v1359
  %v1455 = vunpack.c.l.b16 %v1360
  %v1456 = vunpack.c.h.b16 %v1360
  %v1457 = vpack.c.b16 %v1393, %v1393
  %v1458 = vpack.c.b16 %v1394, %v1394
  %v1459 = vpack.c.b16 %v1395, %v1395
  %v1460 = vpack.c.b16 %v1396, %v1396
  %v1461 = vpack.c.b16 %v1397, %v1397
  %v1462 = vpack.c.b16 %v1398, %v1398
  %v1463 = vpack.c.b16 %v1399, %v1399
  %v1464 = vpack.c.b16 %v1400, %v1400
  %v1465 = vpack.c.b16 %v1401, %v1401
  %v1466 = vpack.c.b16 %v1402, %v1402
  %v1467 = vpack.c.b16 %v1403, %v1403
  %v1468 = vpack.c.b16 %v1404, %v1404
  %v1469 = vpack.c.b16 %v1405, %v1405
  %v1470 = vpack.c.b16 %v1406, %v1406
  %v1471 = vpack.c.b16 %v1407, %v1407
  %v1472 = vpack.c.b16 %v1408, %v1408
  %v1473 = vpack.c.b16 %v1409, %v1409
  %v1474 = vpack.c.b16 %v1410, %v1410
  %v1475 = vpack.c.b16 %v1411, %v1411
  %v1476 = vpack.c.b16 %v1412, %v1412
  %v1477 = vpack.c.b16 %v1413, %v1413
  %v1478 = vpack.c.b16 %v1414, %v1414
  %v1479 = vpack.c.b16 %v1415, %v1415
  %v1480 = vpack.c.b16 %v1416, %v1416
  %v1481 = vpack.c.b16 %v1417, %v1417
  %v1482 = vpack.c.b16 %v1418, %v1418
  %v1483 = vpack.c.b16 %v1419, %v1419
  %v1484 = vpack.c.b16 %v1420, %v1420
  %v1485 = vpack.c.b16 %v1421, %v1421
  %v1486 = vpack.c.b16 %v1422, %v1422
  %v1487 = vpack.c.b16 %v1423, %v1423
  %v1488 = vpack.c.b16 %v1424, %v1424
  %v1489 = vpack.c.b16 %v1425, %v1425
  %v1490 = vpack.c.b16 %v1426, %v1426
  %v1491 = vpack.c.b16 %v1427, %v1427
  %v1492 = vpack.c.b16 %v1428, %v1428
  %v1493 = vpack.c.b16 %v1429, %v1429
  %v1494 = vpack.c.b16 %v1430, %v1430
  %v1495 = vpack.c.b16 %v1431, %v1431
  %v1496 = vpack.c.b16 %v1432, %v1432
  %v1497 = vpack.c.b16 %v1433, %v1433
  %v1498 = vpack.c.b16 %v1434, %v1434
  %v1499 = vpack.c.b16 %v1435, %v1435
  %v1500 = vpack.c.b16 %v1436, %v1436
  %v1501 = vpack.c.b16 %v1437, %v1437
  %v1502 = vpack.c.b16 %v1438, %v1438
  %v1503 = vpack.c.b16 %v1439, %v1439
  %v1504 = vpack.c.b16 %v1440, %v1440
  %v1505 = vpack.c.b16 %v1441, %v1441
  %v1506 = vpack.c.b16 %v1442, %v1442
  %v1507 = vpack.c.b16 %v1443, %v1443
  %v1508 = vpack.c.b16 %v1444, %v1444
  %v1509 = vpack.c.b16 %v1445, %v1445
  %v1510 = vpack.c.b16 %v1446, %v1446
  %v1511 = vpack.c.b16 %v1447, %v1447
  %v1512 = vpack.c.b16 %v1448, %v1448
  %v1513 = vpack.c.b16 %v1449, %v1449
  %v1514 = vpack.c.b16 %v1450, %v1450
  %v1515 = vpack.c.b16 %v1451, %v1451
  %v1516 = vpack.c.b16 %v1452, %v1452
  %v1517 = vpack.c.b16 %v1453, %v1453
  %v1518 = vpack.c.b16 %v1454, %v1454
  %v1519 = vpack.c.b16 %v1455, %v1455
  %v1520 = vpack.c.b16 %v1456, %v1456
  %vm1585 = vcmask 27648
  %1586 = vst.msk [vmem:[%s5] sm:$0xf] %vm1585, %v1457
  %1587 = vst.msk [vmem:[%s5 + $0x4] sm:$0xf] %vm1585, %v1458
  %1588 = vst.msk [vmem:[%s5 + $0x8] sm:$0xf] %vm1585, %v1459
  %1589 = vst.msk [vmem:[%s5 + $0xc] sm:$0xf] %vm1585, %v1460
  %1590 = vst.msk [vmem:[%s5 + $0x10] sm:$0xf] %vm1585, %v1461
  %1591 = vst.msk [vmem:[%s5 + $0x14] sm:$0xf] %vm1585, %v1462
  %1592 = vst.msk [vmem:[%s5 + $0x18] sm:$0xf] %vm1585, %v1463
  %1593 = vst.msk [vmem:[%s5 + $0x1c] sm:$0xf] %vm1585, %v1464
  %1594 = vst.msk [vmem:[%s5 + $0x20] sm:$0xf] %vm1585, %v1465
  %1595 = vst.msk [vmem:[%s5 + $0x24] sm:$0xf] %vm1585, %v1466
  %1596 = vst.msk [vmem:[%s5 + $0x28] sm:$0xf] %vm1585, %v1467
  %1597 = vst.msk [vmem:[%s5 + $0x2c] sm:$0xf] %vm1585, %v1468
  %1598 = vst.msk [vmem:[%s5 + $0x30] sm:$0xf] %vm1585, %v1469
  %1599 = vst.msk [vmem:[%s5 + $0x34] sm:$0xf] %vm1585, %v1470
  %1600 = vst.msk [vmem:[%s5 + $0x38] sm:$0xf] %vm1585, %v1471
  %1601 = vst.msk [vmem:[%s5 + $0x3c] sm:$0xf] %vm1585, %v1472
  %1602 = vst.msk [vmem:[%s5 + $0x40] sm:$0xf] %vm1585, %v1473
  %1603 = vst.msk [vmem:[%s5 + $0x44] sm:$0xf] %vm1585, %v1474
  %1604 = vst.msk [vmem:[%s5 + $0x48] sm:$0xf] %vm1585, %v1475
  %1605 = vst.msk [vmem:[%s5 + $0x4c] sm:$0xf] %vm1585, %v1476
  %1606 = vst.msk [vmem:[%s5 + $0x50] sm:$0xf] %vm1585, %v1477
  %1607 = vst.msk [vmem:[%s5 + $0x54] sm:$0xf] %vm1585, %v1478
  %1608 = vst.msk [vmem:[%s5 + $0x58] sm:$0xf] %vm1585, %v1479
  %1609 = vst.msk [vmem:[%s5 + $0x5c] sm:$0xf] %vm1585, %v1480
  %1610 = vst.msk [vmem:[%s5 + $0x60] sm:$0xf] %vm1585, %v1481
  %1611 = vst.msk [vmem:[%s5 + $0x64] sm:$0xf] %vm1585, %v1482
  %1612 = vst.msk [vmem:[%s5 + $0x68] sm:$0xf] %vm1585, %v1483
  %1613 = vst.msk [vmem:[%s5 + $0x6c] sm:$0xf] %vm1585, %v1484
  %1614 = vst.msk [vmem:[%s5 + $0x70] sm:$0xf] %vm1585, %v1485
  %1615 = vst.msk [vmem:[%s5 + $0x74] sm:$0xf] %vm1585, %v1486
  %1616 = vst.msk [vmem:[%s5 + $0x78] sm:$0xf] %vm1585, %v1487
  %1617 = vst.msk [vmem:[%s5 + $0x7c] sm:$0xf] %vm1585, %v1488
  %1618 = vst.msk [vmem:[%s5 + $0x80] sm:$0xf] %vm1585, %v1489
  %1619 = vst.msk [vmem:[%s5 + $0x84] sm:$0xf] %vm1585, %v1490
  %1620 = vst.msk [vmem:[%s5 + $0x88] sm:$0xf] %vm1585, %v1491
  %1621 = vst.msk [vmem:[%s5 + $0x8c] sm:$0xf] %vm1585, %v1492
  %1622 = vst.msk [vmem:[%s5 + $0x90] sm:$0xf] %vm1585, %v1493
  %1623 = vst.msk [vmem:[%s5 + $0x94] sm:$0xf] %vm1585, %v1494
  %1624 = vst.msk [vmem:[%s5 + $0x98] sm:$0xf] %vm1585, %v1495
  %1625 = vst.msk [vmem:[%s5 + $0x9c] sm:$0xf] %vm1585, %v1496
  %1626 = vst.msk [vmem:[%s5 + $0xa0] sm:$0xf] %vm1585, %v1497
  %1627 = vst.msk [vmem:[%s5 + $0xa4] sm:$0xf] %vm1585, %v1498
  %1628 = vst.msk [vmem:[%s5 + $0xa8] sm:$0xf] %vm1585, %v1499
  %1629 = vst.msk [vmem:[%s5 + $0xac] sm:$0xf] %vm1585, %v1500
  %1630 = vst.msk [vmem:[%s5 + $0xb0] sm:$0xf] %vm1585, %v1501
  %1631 = vst.msk [vmem:[%s5 + $0xb4] sm:$0xf] %vm1585, %v1502
  %1632 = vst.msk [vmem:[%s5 + $0xb8] sm:$0xf] %vm1585, %v1503
  %1633 = vst.msk [vmem:[%s5 + $0xbc] sm:$0xf] %vm1585, %v1504
  %1634 = vst.msk [vmem:[%s5 + $0xc0] sm:$0xf] %vm1585, %v1505
  %1635 = vst.msk [vmem:[%s5 + $0xc4] sm:$0xf] %vm1585, %v1506
  %1636 = vst.msk [vmem:[%s5 + $0xc8] sm:$0xf] %vm1585, %v1507
  %1637 = vst.msk [vmem:[%s5 + $0xcc] sm:$0xf] %vm1585, %v1508
  %1638 = vst.msk [vmem:[%s5 + $0xd0] sm:$0xf] %vm1585, %v1509
  %1639 = vst.msk [vmem:[%s5 + $0xd4] sm:$0xf] %vm1585, %v1510
  %1640 = vst.msk [vmem:[%s5 + $0xd8] sm:$0xf] %vm1585, %v1511
  %1641 = vst.msk [vmem:[%s5 + $0xdc] sm:$0xf] %vm1585, %v1512
  %1642 = vst.msk [vmem:[%s5 + $0xe0] sm:$0xf] %vm1585, %v1513
  %1643 = vst.msk [vmem:[%s5 + $0xe4] sm:$0xf] %vm1585, %v1514
  %1644 = vst.msk [vmem:[%s5 + $0xe8] sm:$0xf] %vm1585, %v1515
  %1645 = vst.msk [vmem:[%s5 + $0xec] sm:$0xf] %vm1585, %v1516
  %1646 = vst.msk [vmem:[%s5 + $0xf0] sm:$0xf] %vm1585, %v1517
  %1647 = vst.msk [vmem:[%s5 + $0xf4] sm:$0xf] %vm1585, %v1518
  %1648 = vst.msk [vmem:[%s5 + $0xf8] sm:$0xf] %vm1585, %v1519
  %1649 = vst.msk [vmem:[%s5 + $0xfc] sm:$0xf] %vm1585, %v1520
  %v1650 = vsub.f32 0.0, %v691
  %v1651 = vsub.f32 0.0, %v694
  %v1652 = vsub.f32 0.0, %v699
  %v1653 = vsub.f32 0.0, %v702
  %v1654 = vsub.f32 0.0, %v707
  %v1655 = vsub.f32 0.0, %v710
  %v1656 = vsub.f32 0.0, %v715
  %v1657 = vsub.f32 0.0, %v718
  %v1658 = vsub.f32 0.0, %v723
  %v1659 = vsub.f32 0.0, %v726
  %v1660 = vsub.f32 0.0, %v731
  %v1661 = vsub.f32 0.0, %v734
  %v1662 = vsub.f32 0.0, %v739
  %v1663 = vsub.f32 0.0, %v742
  %v1664 = vsub.f32 0.0, %v747
  %v1665 = vsub.f32 0.0, %v750
  %v1666 = vsub.f32 0.0, %v755
  %v1667 = vsub.f32 0.0, %v758
  %v1668 = vsub.f32 0.0, %v763
  %v1669 = vsub.f32 0.0, %v766
  %v1670 = vsub.f32 0.0, %v771
  %v1671 = vsub.f32 0.0, %v774
  %v1672 = vsub.f32 0.0, %v779
  %v1673 = vsub.f32 0.0, %v782
  %v1674 = vsub.f32 0.0, %v787
  %v1675 = vsub.f32 0.0, %v790
  %v1676 = vsub.f32 0.0, %v795
  %v1677 = vsub.f32 0.0, %v798
  %v1678 = vsub.f32 0.0, %v803
  %v1679 = vsub.f32 0.0, %v806
  %v1680 = vsub.f32 0.0, %v811
  %v1681 = vsub.f32 0.0, %v814
  %v1682 = vsub.f32 0.0, %v819
  %v1683 = vsub.f32 0.0, %v822
  %v1684 = vsub.f32 0.0, %v827
  %v1685 = vsub.f32 0.0, %v830
  %v1686 = vsub.f32 0.0, %v835
  %v1687 = vsub.f32 0.0, %v838
  %v1688 = vsub.f32 0.0, %v843
  %v1689 = vsub.f32 0.0, %v846
  %v1690 = vsub.f32 0.0, %v851
  %v1691 = vsub.f32 0.0, %v854
  %v1692 = vsub.f32 0.0, %v859
  %v1693 = vsub.f32 0.0, %v862
  %v1694 = vsub.f32 0.0, %v867
  %v1695 = vsub.f32 0.0, %v870
  %v1696 = vsub.f32 0.0, %v875
  %v1697 = vsub.f32 0.0, %v878
  %v1698 = vsub.f32 0.0, %v883
  %v1699 = vsub.f32 0.0, %v886
  %v1700 = vsub.f32 0.0, %v891
  %v1701 = vsub.f32 0.0, %v894
  %v1702 = vsub.f32 0.0, %v899
  %v1703 = vsub.f32 0.0, %v902
  %v1704 = vsub.f32 0.0, %v907
  %v1705 = vsub.f32 0.0, %v910
  %v1706 = vsub.f32 0.0, %v915
  %v1707 = vsub.f32 0.0, %v918
  %v1708 = vsub.f32 0.0, %v923
  %v1709 = vsub.f32 0.0, %v926
  %v1710 = vsub.f32 0.0, %v931
  %v1711 = vsub.f32 0.0, %v934
  %v1712 = vsub.f32 0.0, %v939
  %v1713 = vsub.f32 0.0, %v942
  %v1714 = vmul.f32 %v1650, 1.442695
  %v1715 = vpow.pop %v1714
  %v1716 = vmul.f32 %v1651, 1.442695
  %v1717 = vpow.pop %v1716
  %v1718 = vmul.f32 %v1652, 1.442695
  %v1719 = vpow.pop %v1718
  %v1720 = vmul.f32 %v1653, 1.442695
  %v1721 = vpow.pop %v1720
  %v1722 = vmul.f32 %v1654, 1.442695
  %v1723 = vpow.pop %v1722
  %v1724 = vmul.f32 %v1655, 1.442695
  %v1725 = vpow.pop %v1724
  %v1726 = vmul.f32 %v1656, 1.442695
  %v1727 = vpow.pop %v1726
  %v1728 = vmul.f32 %v1657, 1.442695
  %v1729 = vpow.pop %v1728
  %v1730 = vmul.f32 %v1658, 1.442695
  %v1731 = vpow.pop %v1730
  %v1732 = vmul.f32 %v1659, 1.442695
  %v1733 = vpow.pop %v1732
  %v1734 = vmul.f32 %v1660, 1.442695
  %v1735 = vpow.pop %v1734
  %v1736 = vmul.f32 %v1661, 1.442695
  %v1737 = vpow.pop %v1736
  %v1738 = vmul.f32 %v1662, 1.442695
  %v1739 = vpow.pop %v1738
  %v1740 = vmul.f32 %v1663, 1.442695
  %v1741 = vpow.pop %v1740
  %v1742 = vmul.f32 %v1664, 1.442695
  %v1743 = vpow.pop %v1742
  %v1744 = vmul.f32 %v1665, 1.442695
  %v1745 = vpow.pop %v1744
  %v1746 = vmul.f32 %v1666, 1.442695
  %v1747 = vpow.pop %v1746
  %v1748 = vmul.f32 %v1667, 1.442695
  %v1749 = vpow.pop %v1748
  %v1750 = vmul.f32 %v1668, 1.442695
  %v1751 = vpow.pop %v1750
  %v1752 = vmul.f32 %v1669, 1.442695
  %v1753 = vpow.pop %v1752
  %v1754 = vmul.f32 %v1670, 1.442695
  %v1755 = vpow.pop %v1754
  %v1756 = vmul.f32 %v1671, 1.442695
  %v1757 = vpow.pop %v1756
  %v1758 = vmul.f32 %v1672, 1.442695
  %v1759 = vpow.pop %v1758
  %v1760 = vmul.f32 %v1673, 1.442695
  %v1761 = vpow.pop %v1760
  %v1762 = vmul.f32 %v1674, 1.442695
  %v1763 = vpow.pop %v1762
  %v1764 = vmul.f32 %v1675, 1.442695
  %v1765 = vpow.pop %v1764
  %v1766 = vmul.f32 %v1676, 1.442695
  %v1767 = vpow.pop %v1766
  %v1768 = vmul.f32 %v1677, 1.442695
  %v1769 = vpow.pop %v1768
  %v1770 = vmul.f32 %v1678, 1.442695
  %v1771 = vpow.pop %v1770
  %v1772 = vmul.f32 %v1679, 1.442695
  %v1773 = vpow.pop %v1772
  %v1774 = vmul.f32 %v1680, 1.442695
  %v1775 = vpow.pop %v1774
  %v1776 = vmul.f32 %v1681, 1.442695
  %v1777 = vpow.pop %v1776
  %v1778 = vmul.f32 %v1682, 1.442695
  %v1779 = vpow.pop %v1778
  %v1780 = vmul.f32 %v1683, 1.442695
  %v1781 = vpow.pop %v1780
  %v1782 = vmul.f32 %v1684, 1.442695
  %v1783 = vpow.pop %v1782
  %v1784 = vmul.f32 %v1685, 1.442695
  %v1785 = vpow.pop %v1784
  %v1786 = vmul.f32 %v1686, 1.442695
  %v1787 = vpow.pop %v1786
  %v1788 = vmul.f32 %v1687, 1.442695
  %v1789 = vpow.pop %v1788
  %v1790 = vmul.f32 %v1688, 1.442695
  %v1791 = vpow.pop %v1790
  %v1792 = vmul.f32 %v1689, 1.442695
  %v1793 = vpow.pop %v1792
  %v1794 = vmul.f32 %v1690, 1.442695
  %v1795 = vpow.pop %v1794
  %v1796 = vmul.f32 %v1691, 1.442695
  %v1797 = vpow.pop %v1796
  %v1798 = vmul.f32 %v1692, 1.442695
  %v1799 = vpow.pop %v1798
  %v1800 = vmul.f32 %v1693, 1.442695
  %v1801 = vpow.pop %v1800
  %v1802 = vmul.f32 %v1694, 1.442695
  %v1803 = vpow.pop %v1802
  %v1804 = vmul.f32 %v1695, 1.442695
  %v1805 = vpow.pop %v1804
  %v1806 = vmul.f32 %v1696, 1.442695
  %v1807 = vpow.pop %v1806
  %v1808 = vmul.f32 %v1697, 1.442695
  %v1809 = vpow.pop %v1808
  %v1810 = vmul.f32 %v1698, 1.442695
  %v1811 = vpow.pop %v1810
  %v1812 = vmul.f32 %v1699, 1.442695
  %v1813 = vpow.pop %v1812
  %v1814 = vmul.f32 %v1700, 1.442695
  %v1815 = vpow.pop %v1814
  %v1816 = vmul.f32 %v1701, 1.442695
  %v1817 = vpow.pop %v1816
  %v1818 = vmul.f32 %v1702, 1.442695
  %v1819 = vpow.pop %v1818
  %v1820 = vmul.f32 %v1703, 1.442695
  %v1821 = vpow.pop %v1820
  %v1822 = vmul.f32 %v1704, 1.442695
  %v1823 = vpow.pop %v1822
  %v1824 = vmul.f32 %v1705, 1.442695
  %v1825 = vpow.pop %v1824
  %v1826 = vmul.f32 %v1706, 1.442695
  %v1827 = vpow.pop %v1826
  %v1828 = vmul.f32 %v1707, 1.442695
  %v1829 = vpow.pop %v1828
  %v1830 = vmul.f32 %v1708, 1.442695
  %v1831 = vpow.pop %v1830
  %v1832 = vmul.f32 %v1709, 1.442695
  %v1833 = vpow.pop %v1832
  %v1834 = vmul.f32 %v1710, 1.442695
  %v1835 = vpow.pop %v1834
  %v1836 = vmul.f32 %v1711, 1.442695
  %v1837 = vpow.pop %v1836
  %v1838 = vmul.f32 %v1712, 1.442695
  %v1839 = vpow.pop %v1838
  %v1840 = vmul.f32 %v1713, 1.442695
  %v1841 = vpow.pop %v1840
  %v1842 = vadd.f32 %v1715, 1.0
  %v1843 = vadd.f32 %v1717, 1.0
  %v1844 = vadd.f32 %v1719, 1.0
  %v1845 = vadd.f32 %v1721, 1.0
  %v1846 = vadd.f32 %v1723, 1.0
  %v1847 = vadd.f32 %v1725, 1.0
  %v1848 = vadd.f32 %v1727, 1.0
  %v1849 = vadd.f32 %v1729, 1.0
  %v1850 = vadd.f32 %v1731, 1.0
  %v1851 = vadd.f32 %v1733, 1.0
  %v1852 = vadd.f32 %v1735, 1.0
  %v1853 = vadd.f32 %v1737, 1.0
  %v1854 = vadd.f32 %v1739, 1.0
  %v1855 = vadd.f32 %v1741, 1.0
  %v1856 = vadd.f32 %v1743, 1.0
  %v1857 = vadd.f32 %v1745, 1.0
  %v1858 = vadd.f32 %v1747, 1.0
  %v1859 = vadd.f32 %v1749, 1.0
  %v1860 = vadd.f32 %v1751, 1.0
  %v1861 = vadd.f32 %v1753, 1.0
  %v1862 = vadd.f32 %v1755, 1.0
  %v1863 = vadd.f32 %v1757, 1.0
  %v1864 = vadd.f32 %v1759, 1.0
  %v1865 = vadd.f32 %v1761, 1.0
  %v1866 = vadd.f32 %v1763, 1.0
  %v1867 = vadd.f32 %v1765, 1.0
  %v1868 = vadd.f32 %v1767, 1.0
  %v1869 = vadd.f32 %v1769, 1.0
  %v1870 = vadd.f32 %v1771, 1.0
  %v1871 = vadd.f32 %v1773, 1.0
  %v1872 = vadd.f32 %v1775, 1.0
  %v1873 = vadd.f32 %v1777, 1.0
  %v1874 = vadd.f32 %v1779, 1.0
  %v1875 = vadd.f32 %v1781, 1.0
  %v1876 = vadd.f32 %v1783, 1.0
  %v1877 = vadd.f32 %v1785, 1.0
  %v1878 = vadd.f32 %v1787, 1.0
  %v1879 = vadd.f32 %v1789, 1.0
  %v1880 = vadd.f32 %v1791, 1.0
  %v1881 = vadd.f32 %v1793, 1.0
  %v1882 = vadd.f32 %v1795, 1.0
  %v1883 = vadd.f32 %v1797, 1.0
  %v1884 = vadd.f32 %v1799, 1.0
  %v1885 = vadd.f32 %v1801, 1.0
  %v1886 = vadd.f32 %v1803, 1.0
  %v1887 = vadd.f32 %v1805, 1.0
  %v1888 = vadd.f32 %v1807, 1.0
  %v1889 = vadd.f32 %v1809, 1.0
  %v1890 = vadd.f32 %v1811, 1.0
  %v1891 = vadd.f32 %v1813, 1.0
  %v1892 = vadd.f32 %v1815, 1.0
  %v1893 = vadd.f32 %v1817, 1.0
  %v1894 = vadd.f32 %v1819, 1.0
  %v1895 = vadd.f32 %v1821, 1.0
  %v1896 = vadd.f32 %v1823, 1.0
  %v1897 = vadd.f32 %v1825, 1.0
  %v1898 = vadd.f32 %v1827, 1.0
  %v1899 = vadd.f32 %v1829, 1.0
  %v1900 = vadd.f32 %v1831, 1.0
  %v1901 = vadd.f32 %v1833, 1.0
  %v1902 = vadd.f32 %v1835, 1.0
  %v1903 = vadd.f32 %v1837, 1.0
  %v1904 = vadd.f32 %v1839, 1.0
  %v1905 = vadd.f32 %v1841, 1.0
  %v1906 = vrcp.pop %v1842
  %v1907 = vrcp.pop %v1843
  %v1908 = vrcp.pop %v1844
  %v1909 = vrcp.pop %v1845
  %v1910 = vrcp.pop %v1846
  %v1911 = vrcp.pop %v1847
  %v1912 = vrcp.pop %v1848
  %v1913 = vrcp.pop %v1849
  %v1914 = vrcp.pop %v1850
  %v1915 = vrcp.pop %v1851
  %v1916 = vrcp.pop %v1852
  %v1917 = vrcp.pop %v1853
  %v1918 = vrcp.pop %v1854
  %v1919 = vrcp.pop %v1855
  %v1920 = vrcp.pop %v1856
  %v1921 = vrcp.pop %v1857
  %v1922 = vrcp.pop %v1858
  %v1923 = vrcp.pop %v1859
  %v1924 = vrcp.pop %v1860
  %v1925 = vrcp.pop %v1861
  %v1926 = vrcp.pop %v1862
  %v1927 = vrcp.pop %v1863
  %v1928 = vrcp.pop %v1864
  %v1929 = vrcp.pop %v1865
  %v1930 = vrcp.pop %v1866
  %v1931 = vrcp.pop %v1867
  %v1932 = vrcp.pop %v1868
  %v1933 = vrcp.pop %v1869
  %v1934 = vrcp.pop %v1870
  %v1935 = vrcp.pop %v1871
  %v1936 = vrcp.pop %v1872
  %v1937 = vrcp.pop %v1873
  %v1938 = vrcp.pop %v1874
  %v1939 = vrcp.pop %v1875
  %v1940 = vrcp.pop %v1876
  %v1941 = vrcp.pop %v1877
  %v1942 = vrcp.pop %v1878
  %v1943 = vrcp.pop %v1879
  %v1944 = vrcp.pop %v1880
  %v1945 = vrcp.pop %v1881
  %v1946 = vrcp.pop %v1882
  %v1947 = vrcp.pop %v1883
  %v1948 = vrcp.pop %v1884
  %v1949 = vrcp.pop %v1885
  %v1950 = vrcp.pop %v1886
  %v1951 = vrcp.pop %v1887
  %v1952 = vrcp.pop %v1888
  %v1953 = vrcp.pop %v1889
  %v1954 = vrcp.pop %v1890
  %v1955 = vrcp.pop %v1891
  %v1956 = vrcp.pop %v1892
  %v1957 = vrcp.pop %v1893
  %v1958 = vrcp.pop %v1894
  %v1959 = vrcp.pop %v1895
  %v1960 = vrcp.pop %v1896
  %v1961 = vrcp.pop %v1897
  %v1962 = vrcp.pop %v1898
  %v1963 = vrcp.pop %v1899
  %v1964 = vrcp.pop %v1900
  %v1965 = vrcp.pop %v1901
  %v1966 = vrcp.pop %v1902
  %v1967 = vrcp.pop %v1903
  %v1968 = vrcp.pop %v1904
  %v1969 = vrcp.pop %v1905
  %v1970 = vmul.f32 %v691, %v1906
  %v1971 = vmul.f32 %v694, %v1907
  %v1972 = vmul.f32 %v699, %v1908
  %v1973 = vmul.f32 %v702, %v1909
  %v1974 = vmul.f32 %v707, %v1910
  %v1975 = vmul.f32 %v710, %v1911
  %v1976 = vmul.f32 %v715, %v1912
  %v1977 = vmul.f32 %v718, %v1913
  %v1978 = vmul.f32 %v723, %v1914
  %v1979 = vmul.f32 %v726, %v1915
  %v1980 = vmul.f32 %v731, %v1916
  %v1981 = vmul.f32 %v734, %v1917
  %v1982 = vmul.f32 %v739, %v1918
  %v1983 = vmul.f32 %v742, %v1919
  %v1984 = vmul.f32 %v747, %v1920
  %v1985 = vmul.f32 %v750, %v1921
  %v1986 = vmul.f32 %v755, %v1922
  %v1987 = vmul.f32 %v758, %v1923
  %v1988 = vmul.f32 %v763, %v1924
  %v1989 = vmul.f32 %v766, %v1925
  %v1990 = vmul.f32 %v771, %v1926
  %v1991 = vmul.f32 %v774, %v1927
  %v1992 = vmul.f32 %v779, %v1928
  %v1993 = vmul.f32 %v782, %v1929
  %v1994 = vmul.f32 %v787, %v1930
  %v1995 = vmul.f32 %v790, %v1931
  %v1996 = vmul.f32 %v795, %v1932
  %v1997 = vmul.f32 %v798, %v1933
  %v1998 = vmul.f32 %v803, %v1934
  %v1999 = vmul.f32 %v806, %v1935
  %v2000 = vmul.f32 %v811, %v1936
  %v2001 = vmul.f32 %v814, %v1937
  %v2002 = vmul.f32 %v819, %v1938
  %v2003 = vmul.f32 %v822, %v1939
  %v2004 = vmul.f32 %v827, %v1940
  %v2005 = vmul.f32 %v830, %v1941
  %v2006 = vmul.f32 %v835, %v1942
  %v2007 = vmul.f32 %v838, %v1943
  %v2008 = vmul.f32 %v843, %v1944
  %v2009 = vmul.f32 %v846, %v1945
  %v2010 = vmul.f32 %v851, %v1946
  %v2011 = vmul.f32 %v854, %v1947
  %v2012 = vmul.f32 %v859, %v1948
  %v2013 = vmul.f32 %v862, %v1949
  %v2014 = vmul.f32 %v867, %v1950
  %v2015 = vmul.f32 %v870, %v1951
  %v2016 = vmul.f32 %v875, %v1952
  %v2017 = vmul.f32 %v878, %v1953
  %v2018 = vmul.f32 %v883, %v1954
  %v2019 = vmul.f32 %v886, %v1955
  %v2020 = vmul.f32 %v891, %v1956
  %v2021 = vmul.f32 %v894, %v1957
  %v2022 = vmul.f32 %v899, %v1958
  %v2023 = vmul.f32 %v902, %v1959
  %v2024 = vmul.f32 %v907, %v1960
  %v2025 = vmul.f32 %v910, %v1961
  %v2026 = vmul.f32 %v915, %v1962
  %v2027 = vmul.f32 %v918, %v1963
  %v2028 = vmul.f32 %v923, %v1964
  %v2029 = vmul.f32 %v926, %v1965
  %v2030 = vmul.f32 %v931, %v1966
  %v2031 = vmul.f32 %v934, %v1967
  %v2032 = vmul.f32 %v939, %v1968
  %v2033 = vmul.f32 %v942, %v1969
  %v2034 = vpack.c.bf16 %v1971, %v1970
  %v2035 = vpack.c.bf16 %v1973, %v1972
  %v2036 = vpack.c.bf16 %v1975, %v1974
  %v2037 = vpack.c.bf16 %v1977, %v1976
  %v2038 = vpack.c.bf16 %v1979, %v1978
  %v2039 = vpack.c.bf16 %v1981, %v1980
  %v2040 = vpack.c.bf16 %v1983, %v1982
  %v2041 = vpack.c.bf16 %v1985, %v1984
  %v2042 = vpack.c.bf16 %v1987, %v1986
  %v2043 = vpack.c.bf16 %v1989, %v1988
  %v2044 = vpack.c.bf16 %v1991, %v1990
  %v2045 = vpack.c.bf16 %v1993, %v1992
  %v2046 = vpack.c.bf16 %v1995, %v1994
  %v2047 = vpack.c.bf16 %v1997, %v1996
  %v2048 = vpack.c.bf16 %v1999, %v1998
  %v2049 = vpack.c.bf16 %v2001, %v2000
  %v2050 = vpack.c.bf16 %v2003, %v2002
  %v2051 = vpack.c.bf16 %v2005, %v2004
  %v2052 = vpack.c.bf16 %v2007, %v2006
  %v2053 = vpack.c.bf16 %v2009, %v2008
  %v2054 = vpack.c.bf16 %v2011, %v2010
  %v2055 = vpack.c.bf16 %v2013, %v2012
  %v2056 = vpack.c.bf16 %v2015, %v2014
  %v2057 = vpack.c.bf16 %v2017, %v2016
  %v2058 = vpack.c.bf16 %v2019, %v2018
  %v2059 = vpack.c.bf16 %v2021, %v2020
  %v2060 = vpack.c.bf16 %v2023, %v2022
  %v2061 = vpack.c.bf16 %v2025, %v2024
  %v2062 = vpack.c.bf16 %v2027, %v2026
  %v2063 = vpack.c.bf16 %v2029, %v2028
  %v2064 = vpack.c.bf16 %v2031, %v2030
  %v2065 = vpack.c.bf16 %v2033, %v2032
  %v2098 = vunpack.c.l.b16 %v2034
  %v2099 = vunpack.c.h.b16 %v2034
  %v2100 = vunpack.c.l.b16 %v2035
  %v2101 = vunpack.c.h.b16 %v2035
  %v2102 = vunpack.c.l.b16 %v2036
  %v2103 = vunpack.c.h.b16 %v2036
  %v2104 = vunpack.c.l.b16 %v2037
  %v2105 = vunpack.c.h.b16 %v2037
  %v2106 = vunpack.c.l.b16 %v2038
  %v2107 = vunpack.c.h.b16 %v2038
  %v2108 = vunpack.c.l.b16 %v2039
  %v2109 = vunpack.c.h.b16 %v2039
  %v2110 = vunpack.c.l.b16 %v2040
  %v2111 = vunpack.c.h.b16 %v2040
  %v2112 = vunpack.c.l.b16 %v2041
  %v2113 = vunpack.c.h.b16 %v2041
  %v2114 = vunpack.c.l.b16 %v2042
  %v2115 = vunpack.c.h.b16 %v2042
  %v2116 = vunpack.c.l.b16 %v2043
  %v2117 = vunpack.c.h.b16 %v2043
  %v2118 = vunpack.c.l.b16 %v2044
  %v2119 = vunpack.c.h.b16 %v2044
  %v2120 = vunpack.c.l.b16 %v2045
  %v2121 = vunpack.c.h.b16 %v2045
  %v2122 = vunpack.c.l.b16 %v2046
  %v2123 = vunpack.c.h.b16 %v2046
  %v2124 = vunpack.c.l.b16 %v2047
  %v2125 = vunpack.c.h.b16 %v2047
  %v2126 = vunpack.c.l.b16 %v2048
  %v2127 = vunpack.c.h.b16 %v2048
  %v2128 = vunpack.c.l.b16 %v2049
  %v2129 = vunpack.c.h.b16 %v2049
  %v2130 = vunpack.c.l.b16 %v2050
  %v2131 = vunpack.c.h.b16 %v2050
  %v2132 = vunpack.c.l.b16 %v2051
  %v2133 = vunpack.c.h.b16 %v2051
  %v2134 = vunpack.c.l.b16 %v2052
  %v2135 = vunpack.c.h.b16 %v2052
  %v2136 = vunpack.c.l.b16 %v2053
  %v2137 = vunpack.c.h.b16 %v2053
  %v2138 = vunpack.c.l.b16 %v2054
  %v2139 = vunpack.c.h.b16 %v2054
  %v2140 = vunpack.c.l.b16 %v2055
  %v2141 = vunpack.c.h.b16 %v2055
  %v2142 = vunpack.c.l.b16 %v2056
  %v2143 = vunpack.c.h.b16 %v2056
  %v2144 = vunpack.c.l.b16 %v2057
  %v2145 = vunpack.c.h.b16 %v2057
  %v2146 = vunpack.c.l.b16 %v2058
  %v2147 = vunpack.c.h.b16 %v2058
  %v2148 = vunpack.c.l.b16 %v2059
  %v2149 = vunpack.c.h.b16 %v2059
  %v2150 = vunpack.c.l.b16 %v2060
  %v2151 = vunpack.c.h.b16 %v2060
  %v2152 = vunpack.c.l.b16 %v2061
  %v2153 = vunpack.c.h.b16 %v2061
  %v2154 = vunpack.c.l.b16 %v2062
  %v2155 = vunpack.c.h.b16 %v2062
  %v2156 = vunpack.c.l.b16 %v2063
  %v2157 = vunpack.c.h.b16 %v2063
  %v2158 = vunpack.c.l.b16 %v2064
  %v2159 = vunpack.c.h.b16 %v2064
  %v2160 = vunpack.c.l.b16 %v2065
  %v2161 = vunpack.c.h.b16 %v2065
  %v2162 = vpack.c.b16 %v2098, %v2098
  %v2163 = vpack.c.b16 %v2099, %v2099
  %v2164 = vpack.c.b16 %v2100, %v2100
  %v2165 = vpack.c.b16 %v2101, %v2101
  %v2166 = vpack.c.b16 %v2102, %v2102
  %v2167 = vpack.c.b16 %v2103, %v2103
  %v2168 = vpack.c.b16 %v2104, %v2104
  %v2169 = vpack.c.b16 %v2105, %v2105
  %v2170 = vpack.c.b16 %v2106, %v2106
  %v2171 = vpack.c.b16 %v2107, %v2107
  %v2172 = vpack.c.b16 %v2108, %v2108
  %v2173 = vpack.c.b16 %v2109, %v2109
  %v2174 = vpack.c.b16 %v2110, %v2110
  %v2175 = vpack.c.b16 %v2111, %v2111
  %v2176 = vpack.c.b16 %v2112, %v2112
  %v2177 = vpack.c.b16 %v2113, %v2113
  %v2178 = vpack.c.b16 %v2114, %v2114
  %v2179 = vpack.c.b16 %v2115, %v2115
  %v2180 = vpack.c.b16 %v2116, %v2116
  %v2181 = vpack.c.b16 %v2117, %v2117
  %v2182 = vpack.c.b16 %v2118, %v2118
  %v2183 = vpack.c.b16 %v2119, %v2119
  %v2184 = vpack.c.b16 %v2120, %v2120
  %v2185 = vpack.c.b16 %v2121, %v2121
  %v2186 = vpack.c.b16 %v2122, %v2122
  %v2187 = vpack.c.b16 %v2123, %v2123
  %v2188 = vpack.c.b16 %v2124, %v2124
  %v2189 = vpack.c.b16 %v2125, %v2125
  %v2190 = vpack.c.b16 %v2126, %v2126
  %v2191 = vpack.c.b16 %v2127, %v2127
  %v2192 = vpack.c.b16 %v2128, %v2128
  %v2193 = vpack.c.b16 %v2129, %v2129
  %v2194 = vpack.c.b16 %v2130, %v2130
  %v2195 = vpack.c.b16 %v2131, %v2131
  %v2196 = vpack.c.b16 %v2132, %v2132
  %v2197 = vpack.c.b16 %v2133, %v2133
  %v2198 = vpack.c.b16 %v2134, %v2134
  %v2199 = vpack.c.b16 %v2135, %v2135
  %v2200 = vpack.c.b16 %v2136, %v2136
  %v2201 = vpack.c.b16 %v2137, %v2137
  %v2202 = vpack.c.b16 %v2138, %v2138
  %v2203 = vpack.c.b16 %v2139, %v2139
  %v2204 = vpack.c.b16 %v2140, %v2140
  %v2205 = vpack.c.b16 %v2141, %v2141
  %v2206 = vpack.c.b16 %v2142, %v2142
  %v2207 = vpack.c.b16 %v2143, %v2143
  %v2208 = vpack.c.b16 %v2144, %v2144
  %v2209 = vpack.c.b16 %v2145, %v2145
  %v2210 = vpack.c.b16 %v2146, %v2146
  %v2211 = vpack.c.b16 %v2147, %v2147
  %v2212 = vpack.c.b16 %v2148, %v2148
  %v2213 = vpack.c.b16 %v2149, %v2149
  %v2214 = vpack.c.b16 %v2150, %v2150
  %v2215 = vpack.c.b16 %v2151, %v2151
  %v2216 = vpack.c.b16 %v2152, %v2152
  %v2217 = vpack.c.b16 %v2153, %v2153
  %v2218 = vpack.c.b16 %v2154, %v2154
  %v2219 = vpack.c.b16 %v2155, %v2155
  %v2220 = vpack.c.b16 %v2156, %v2156
  %v2221 = vpack.c.b16 %v2157, %v2157
  %v2222 = vpack.c.b16 %v2158, %v2158
  %v2223 = vpack.c.b16 %v2159, %v2159
  %v2224 = vpack.c.b16 %v2160, %v2160
  %v2225 = vpack.c.b16 %v2161, %v2161
  %2290 = vst.msk [vmem:[%s6] sm:$0xf] %vm1585, %v2162
  %2291 = vst.msk [vmem:[%s6 + $0x4] sm:$0xf] %vm1585, %v2163
  %2292 = vst.msk [vmem:[%s6 + $0x8] sm:$0xf] %vm1585, %v2164
  %2293 = vst.msk [vmem:[%s6 + $0xc] sm:$0xf] %vm1585, %v2165
  %2294 = vst.msk [vmem:[%s6 + $0x10] sm:$0xf] %vm1585, %v2166
  %2295 = vst.msk [vmem:[%s6 + $0x14] sm:$0xf] %vm1585, %v2167
  %2296 = vst.msk [vmem:[%s6 + $0x18] sm:$0xf] %vm1585, %v2168
  %2297 = vst.msk [vmem:[%s6 + $0x1c] sm:$0xf] %vm1585, %v2169
  %2298 = vst.msk [vmem:[%s6 + $0x20] sm:$0xf] %vm1585, %v2170
  %2299 = vst.msk [vmem:[%s6 + $0x24] sm:$0xf] %vm1585, %v2171
  %2300 = vst.msk [vmem:[%s6 + $0x28] sm:$0xf] %vm1585, %v2172
  %2301 = vst.msk [vmem:[%s6 + $0x2c] sm:$0xf] %vm1585, %v2173
  %2302 = vst.msk [vmem:[%s6 + $0x30] sm:$0xf] %vm1585, %v2174
  %2303 = vst.msk [vmem:[%s6 + $0x34] sm:$0xf] %vm1585, %v2175
  %2304 = vst.msk [vmem:[%s6 + $0x38] sm:$0xf] %vm1585, %v2176
  %2305 = vst.msk [vmem:[%s6 + $0x3c] sm:$0xf] %vm1585, %v2177
  %2306 = vst.msk [vmem:[%s6 + $0x40] sm:$0xf] %vm1585, %v2178
  %2307 = vst.msk [vmem:[%s6 + $0x44] sm:$0xf] %vm1585, %v2179
  %2308 = vst.msk [vmem:[%s6 + $0x48] sm:$0xf] %vm1585, %v2180
  %2309 = vst.msk [vmem:[%s6 + $0x4c] sm:$0xf] %vm1585, %v2181
  %2310 = vst.msk [vmem:[%s6 + $0x50] sm:$0xf] %vm1585, %v2182
  %2311 = vst.msk [vmem:[%s6 + $0x54] sm:$0xf] %vm1585, %v2183
  %2312 = vst.msk [vmem:[%s6 + $0x58] sm:$0xf] %vm1585, %v2184
  %2313 = vst.msk [vmem:[%s6 + $0x5c] sm:$0xf] %vm1585, %v2185
  %2314 = vst.msk [vmem:[%s6 + $0x60] sm:$0xf] %vm1585, %v2186
  %2315 = vst.msk [vmem:[%s6 + $0x64] sm:$0xf] %vm1585, %v2187
  %2316 = vst.msk [vmem:[%s6 + $0x68] sm:$0xf] %vm1585, %v2188
  %2317 = vst.msk [vmem:[%s6 + $0x6c] sm:$0xf] %vm1585, %v2189
  %2318 = vst.msk [vmem:[%s6 + $0x70] sm:$0xf] %vm1585, %v2190
  %2319 = vst.msk [vmem:[%s6 + $0x74] sm:$0xf] %vm1585, %v2191
  %2320 = vst.msk [vmem:[%s6 + $0x78] sm:$0xf] %vm1585, %v2192
  %2321 = vst.msk [vmem:[%s6 + $0x7c] sm:$0xf] %vm1585, %v2193
  %2322 = vst.msk [vmem:[%s6 + $0x80] sm:$0xf] %vm1585, %v2194
  %2323 = vst.msk [vmem:[%s6 + $0x84] sm:$0xf] %vm1585, %v2195
  %2324 = vst.msk [vmem:[%s6 + $0x88] sm:$0xf] %vm1585, %v2196
  %2325 = vst.msk [vmem:[%s6 + $0x8c] sm:$0xf] %vm1585, %v2197
  %2326 = vst.msk [vmem:[%s6 + $0x90] sm:$0xf] %vm1585, %v2198
  %2327 = vst.msk [vmem:[%s6 + $0x94] sm:$0xf] %vm1585, %v2199
  %2328 = vst.msk [vmem:[%s6 + $0x98] sm:$0xf] %vm1585, %v2200
  %2329 = vst.msk [vmem:[%s6 + $0x9c] sm:$0xf] %vm1585, %v2201
  %2330 = vst.msk [vmem:[%s6 + $0xa0] sm:$0xf] %vm1585, %v2202
  %2331 = vst.msk [vmem:[%s6 + $0xa4] sm:$0xf] %vm1585, %v2203
  %2332 = vst.msk [vmem:[%s6 + $0xa8] sm:$0xf] %vm1585, %v2204
  %2333 = vst.msk [vmem:[%s6 + $0xac] sm:$0xf] %vm1585, %v2205
  %2334 = vst.msk [vmem:[%s6 + $0xb0] sm:$0xf] %vm1585, %v2206
  %2335 = vst.msk [vmem:[%s6 + $0xb4] sm:$0xf] %vm1585, %v2207
  %2336 = vst.msk [vmem:[%s6 + $0xb8] sm:$0xf] %vm1585, %v2208
  %2337 = vst.msk [vmem:[%s6 + $0xbc] sm:$0xf] %vm1585, %v2209
  %2338 = vst.msk [vmem:[%s6 + $0xc0] sm:$0xf] %vm1585, %v2210
  %2339 = vst.msk [vmem:[%s6 + $0xc4] sm:$0xf] %vm1585, %v2211
  %2340 = vst.msk [vmem:[%s6 + $0xc8] sm:$0xf] %vm1585, %v2212
  %2341 = vst.msk [vmem:[%s6 + $0xcc] sm:$0xf] %vm1585, %v2213
  %2342 = vst.msk [vmem:[%s6 + $0xd0] sm:$0xf] %vm1585, %v2214
  %2343 = vst.msk [vmem:[%s6 + $0xd4] sm:$0xf] %vm1585, %v2215
  %2344 = vst.msk [vmem:[%s6 + $0xd8] sm:$0xf] %vm1585, %v2216
  %2345 = vst.msk [vmem:[%s6 + $0xdc] sm:$0xf] %vm1585, %v2217
  %2346 = vst.msk [vmem:[%s6 + $0xe0] sm:$0xf] %vm1585, %v2218
  %2347 = vst.msk [vmem:[%s6 + $0xe4] sm:$0xf] %vm1585, %v2219
  %2348 = vst.msk [vmem:[%s6 + $0xe8] sm:$0xf] %vm1585, %v2220
  %2349 = vst.msk [vmem:[%s6 + $0xec] sm:$0xf] %vm1585, %v2221
  %2350 = vst.msk [vmem:[%s6 + $0xf0] sm:$0xf] %vm1585, %v2222
  %2351 = vst.msk [vmem:[%s6 + $0xf4] sm:$0xf] %vm1585, %v2223
  %2352 = vst.msk [vmem:[%s6 + $0xf8] sm:$0xf] %vm1585, %v2224
  %2353 = vst.msk [vmem:[%s6 + $0xfc] sm:$0xf] %vm1585, %v2225
  // Predicated region
  $region22: #{tpu_custom_call.1} parent=0 // pred_check
    _
  $region23: #{tpu_custom_call.1} parent=0 // pred_check_branch
    %2355 = sbr.rel (0) target = $region25
  $region24: #{tpu_custom_call.1} parent=0 // pred_region
    _
  $region25: #{tpu_custom_call.1} parent=0 // pred_fallthru
    _
  // Predicated region
  $region26: #{tpu_custom_call.1} parent=0 // pred_check
    _
  $region27: #{tpu_custom_call.1} parent=0 // pred_check_branch
    %2357 = sbr.rel (0) target = $region29
  $region28: #{tpu_custom_call.1} parent=0 // pred_region
    _
  $region29: #{tpu_custom_call.1} parent=0 // pred_fallthru
    _
  // Predicated region
  $region30: #{tpu_custom_call.1} parent=0 // pred_check
    _
  $region31: #{tpu_custom_call.1} parent=0 // pred_check_branch
    %2359 = sbr.rel (0) target = $region33
  $region32: #{tpu_custom_call.1} parent=0 // pred_region
    _
  $region33: #{tpu_custom_call.1} parent=0 // pred_fallthru
    _
  // Predicated region
  $region34: #{tpu_custom_call.1} parent=0 // pred_check
    _
  $region35: #{tpu_custom_call.1} parent=0 // pred_check_branch
    %2361 = sbr.rel (0) target = $region37
  $region36: #{tpu_custom_call.1} parent=0 // pred_region
    _
  $region37: #{tpu_custom_call.1} parent=0 // pred_fallthru
    _

</llo_original>
